<compile_context>
chip_gen: v7x
topology: tpu7x:2x2x1
jax: 0.10.0
libtpu: 0.0.40
codegen_flags: <defaults>
</compile_context>

<pallas_src>
import math

import jax
import jax.numpy as jnp
from jax.experimental import pallas as pl
from jax.experimental.pallas import tpu as pltpu

W_BIT = 4
OUT_BIT = 4
_NW = 2 ** W_BIT - 1      # 15 weight levels  -> integer weights in [-15, 15]
_NA = 2 ** OUT_BIT - 1    # 15 act levels     -> integer activations in [0, 15]


# ------------------------- DoReFa quantizers (wrapper-side, plain XLA) -------------------------

def _weight_quant(w, n=_NW):
    """Reference DoReFa weight quantizer: values k/n, k integer in [-n, n]."""
    t = jnp.tanh(w)
    m = jnp.max(jnp.abs(t))
    m = jnp.where(m == 0, 1.0, m)          # guard all-zero weights (PyTorch would 0/0)
    wn = t / (2.0 * m) + 0.5
    return 2.0 * (jnp.round(wn * n) / n) - 1.0


def _weight_quant_int(w, n=_NW):
    """Integer-level form n*weight_quant(w) = 2*round(wn*n) - n; exact in bf16 / int8."""
    t = jnp.tanh(w)
    m = jnp.max(jnp.abs(t))
    m = jnp.where(m == 0, 1.0, m)
    wn = t / (2.0 * m) + 0.5
    return 2.0 * jnp.round(wn * n) - n


def _round_up(a, b):
    return (a + b - 1) // b * b


# --- GELU o 4-bit quantization thresholds (trace-time constants; removes erf from the kernel).
# round(clip(gelu(h),0,1)*15) == sum_k [h >= T_k] with T_k = gelu^{-1}((k-0.5)/15), since exact
# GELU is strictly increasing wherever its output is >= 0 (negative outputs clip to level 0).

def _gelu_exact(t):
    return 0.5 * t * (1.0 + math.erf(t / math.sqrt(2.0)))


def _gelu_quant_thresholds(n=_NA):
    ths = []
    for k in range(1, n + 1):
        y = (k - 0.5) / n
        lo, hi = 0.0, 4.0
        for _ in range(64):
            mid = 0.5 * (lo + hi)
            if _gelu_exact(mid) < y:
                lo = mid
            else:
                hi = mid
        ths.append(0.5 * (lo + hi))
    return tuple(ths)


_GELU_Q_THRESHOLDS = _gelu_quant_thresholds()


# --------------------------------------------- kernel ---------------------------------------------

def _qmlp_kernel(x_ref, w1_ref, b1_ref, w2_ref, b2_ref, o_ref):
    # x_ref:  (TILE_N, Dinp) f32        token tile (pipelined)
    # w1_ref: (Dinp, Hp)     bf16       integer-level fc1 weights in [-15, 15]  (resident)
    # b1_ref: (1, Hp)        f32
    # w2_ref: (Hp, Doutp)    int8|bf16  integer-level fc2 weights in [-15, 15]  (resident)
    # b2_ref: (1, Doutp)     f32
    x = x_ref[...]

    # ---- GEMM1 on the native bf16 MXU via a two-term bf16 split of x.  w1 holds exact small
    # integers, so x_hi*w and x_lo*w are exact in the f32 accumulator; only the ~2^-16
    # residual of x is dropped.  1/15 weight scale folded into the bias epilogue.
    x_hi = x.astype(jnp.bfloat16)
    x_lo = (x - x_hi.astype(jnp.float32)).astype(jnp.bfloat16)
    w1 = w1_ref[...]
    h = jnp.dot(x_hi, w1, preferred_element_type=jnp.float32)
    h = h + jnp.dot(x_lo, w1, preferred_element_type=jnp.float32)
    h = h * (1.0 / _NW) + b1_ref[...]

    # ---- GELU + 4-bit activation quantization as 15 threshold compares (no erf, VPU only).
    lvl = jnp.zeros_like(h)
    for t in _GELU_Q_THRESHOLDS:
        lvl = lvl + jnp.where(h >= t, 1.0, 0.0)           # integer levels 0..15

    # ---- GEMM2 with exact integer operands; 1/(15*15) scale + bias folded into epilogue.
    if w2_ref.dtype == jnp.int8:                          # native int8 MXU path (v5e/v6e)
        acc = jnp.dot(lvl.astype(jnp.int32).astype(jnp.int8), w2_ref[...],
                      preferred_element_type=jnp.int32).astype(jnp.float32)
    else:                                                 # bf16 path (exact for |v| <= 15)
        acc = jnp.dot(lvl.astype(jnp.bfloat16), w2_ref[...],
                      preferred_element_type=jnp.float32)
    y = acc * (1.0 / (_NA * _NW)) + b2_ref[...]
    o_ref[...] = y.astype(o_ref.dtype)


# -------------------------------------------- wrapper ---------------------------------------------

def _device_config():
    try:
        kind = jax.devices()[0].device_kind.lower()
    except Exception:
        kind = ""
    if "v7" in kind or "7x" in kind:
        # TODO(synk): v7x has no integer MXU; fp8 e4m3 GEMM2 operands (exact for integers
        # |v|<=15) would double throughput once fp8 matmul lowering is verified.
        return dict(gemm2_dtype=jnp.bfloat16, vmem_cap=56 << 20, tile_n=256)
    if "v5" in kind or "v6" in kind:
        return dict(gemm2_dtype=jnp.int8, vmem_cap=100 << 20, tile_n=512)
    return dict(gemm2_dtype=jnp.bfloat16, vmem_cap=64 << 20, tile_n=512)


def quantized_mlp(x, w1, b1, w2, b2, *, tile_n=None):
    """x: (batch, seq, in_features); torch nn.Linear layouts: w1 (hidden,in), w2 (out,hidden)."""
    B, S, Din = x.shape
    H = w1.shape[0]
    Dout = w2.shape[0]
    N = B * S

    cfg = _device_config()
    tile_target = tile_n or cfg["tile_n"]

    # Weight quantization hoisted out of the kernel, in exact integer-level form.
    w1i = _weight_quant_int(w1)          # (H, Din)   integers in [-15, 15]
    w2i = _weight_quant_int(w2)          # (Dout, H)  integers in [-15, 15]

    # Lane-dense padded feature dims (padding after quantization -> padded weights are 0).
    Dinp, Hp, Doutp = (_round_up(d, 128) for d in (Din, H, Dout))

    # Token tiling: minimize padding; keep >=2 grid steps when there is enough work so the
    # 'parallel' axis can split across both TensorCores on v7x.
    n_tiles = -(-N // tile_target)
    if N >= 256:
        n_tiles = max(n_tiles, 2)
    TILE_N = _round_up(-(-N // n_tiles), 32)
    Np = TILE_N * n_tiles

    x2d = x.reshape(N, Din)
    if (Np, Dinp) != (N, Din):                              # skip pad copy when it's a no-op
        x2d = jnp.pad(x2d, ((0, Np - N), (0, Dinp - Din)))
    w1p = jnp.pad(w1i.T, ((0, Dinp - Din), (0, Hp - H))).astype(jnp.bfloat16)
    w2p_f32 = jnp.pad(w2i.T, ((0, Hp - H), (0, Doutp - Dout)))
    b1p = jnp.pad(b1, (0, Hp - H)).reshape(1, Hp).astype(jnp.float32)
    b2p = jnp.pad(b2, (0, Doutp - Dout)).reshape(1, Doutp).astype(jnp.float32)

    grid = (n_tiles,)

    def run(single_buffer_weights, gemm2_dtype):
        w2p = w2p_f32.astype(gemm2_dtype)
        w2_bytes = 1 if gemm2_dtype == jnp.int8 else 2

        def resident(shape):
            idx = lambda i: (0,) * len(shape)
            if single_buffer_weights and hasattr(pl, "Buffered"):
                try:
                    # Constant index_map -> single-buffer the resident operand (half VMEM).
                    return pl.BlockSpec(shape, idx, pipeline_mode=pl.Buffered(1))
                except TypeError:
                    pass
            return pl.BlockSpec(shape, idx)

        weight_mult = 1 if single_buffer_weights else 2
        weight_bytes = weight_mult * (Dinp * Hp * 2 + Hp * Doutp * w2_bytes + Hp * 4 + Doutp * 4)
        io_bytes = 2 * (TILE_N * Dinp * 4 + TILE_N * Doutp * 4)   # double-buffered x / out
        live_bytes = 3 * TILE_N * Hp * 4                          # h / lvl intermediates
        vmem_limit = min(max(int(1.3 * (weight_bytes + io_bytes + live_bytes)) + (4 << 20),
                             32 << 20), cfg["vmem_cap"])

        cost = pl.CostEstimate(
            flops=2 * Np * (Dinp * Hp + Hp * Doutp),
            transcendentals=0,
            bytes_accessed=(Np * Dinp * 4 + Dinp * Hp * 2 + Hp * Doutp * w2_bytes
                            + Hp * 4 + Doutp * 4 + Np * Doutp * 4),
        )

        return pl.pallas_call(
            _qmlp_kernel,
            out_shape=jax.ShapeDtypeStruct((Np, Doutp), x.dtype),
            grid_spec=pltpu.PrefetchScalarGridSpec(
                num_scalar_prefetch=0,
                grid=grid,
                in_specs=[
                    pl.BlockSpec((TILE_N, Dinp), lambda i: (i, 0)),   # x tile (pipelined)
                    resident((Dinp, Hp)),                             # w1 bf16 (resident)
                    resident((1, Hp)),                                # b1
                    resident((Hp, Doutp)),                            # w2 int8/bf16 (resident)
                    resident((1, Doutp)),                             # b2
                ],
                out_specs=pl.BlockSpec((TILE_N, Doutp), lambda i: (i, 0)),
            ),
            compiler_params=pltpu.CompilerParams(
                dimension_semantics=("parallel",),
                vmem_limit_bytes=vmem_limit,
            ),
            cost_estimate=cost,
        )(x2d, w1p, b1p, w2p, b2p)

    try:
        out = run(True, cfg["gemm2_dtype"])
    except Exception:
        # Compatibility fallback (older Pallas / no int8 MXU lowering on this chip):
        # double-buffered weights + bf16 GEMM2.  Identical numerics, just less optimal.
        out = run(False, jnp.bfloat16)

    if (Np, Doutp) != (N, Dout):
        out = out[:N, :Dout]
    return out.reshape(B, S, Dout)


# ------------------------------------------- reference --------------------------------------------

def quantized_mlp_ref(x, w1, b1, w2, b2):
    """Pure-JAX f32 reference mirroring the PyTorch forward."""
    w1q = _weight_quant(w1)
    w2q = _weight_quant(w2)
    h = jnp.einsum("bsd,hd->bsh", x, w1q, precision="highest") + b1
    h = jax.nn.gelu(h, approximate=False)
    h = jnp.round(jnp.clip(h, 0.0, 1.0) * _NA) / _NA
    y = jnp.einsum("bsh,oh->bso", h, w2q, precision="highest") + b2
    return y


if __name__ == "__main__":
    # ViT-for-CIFAR10 style MLP block at small shapes: tokens (batch, seq, in_features).
    batch, seq, in_features = 2, 8, 32
    hidden_features = 64
    out_features = in_features

    key = jax.random.PRNGKey(0)
    kx, kw1, kb1, kw2, kb2 = jax.random.split(key, 5)

    x = jax.random.normal(kx, (batch, seq, in_features), dtype=jnp.float32)
    # torch nn.Linear parameter layout: weight (out, in), bias (out,)
    w1 = jax.random.normal(kw1, (hidden_features, in_features), jnp.float32) * 0.1
    b1 = jax.random.normal(kb1, (hidden_features,), jnp.float32) * 0.05
    w2 = jax.random.normal(kw2, (out_features, hidden_features), jnp.float32) * 0.1
    b2 = jax.random.normal(kb2, (out_features,), jnp.float32) * 0.05

    y = quantized_mlp(x, w1, b1, w2, b2)
    y = jax.block_until_ready(y)
    assert y.shape == (batch, seq, out_features)

    y_ref = quantized_mlp_ref(x, w1, b1, w2, b2)
    diff = jnp.abs(y - y_ref)
    # Numerics: quantization, GEMM2 and biases are exact; GEMM1 uses the review-recommended
    # two-term bf16 split of x, so an activation landing within ~1e-5 of a 1/15 quantization
    # boundary may round to the adjacent level (a measure-zero tie).  Accept either exact
    # agreement or at most a couple of such single-level ties (each bounded by ~max|w2_q|/15
    # on one token row); anything larger indicates a real bug.
    tight = bool(jnp.all(diff <= 2e-5))
    rows_off = int(jnp.sum(jnp.any(diff > 2e-5, axis=-1)))
    ties_ok = (rows_off <= 2) and bool(jnp.max(diff) <= 2.0 / _NA + 1e-3)
    assert tight or ties_ok, f"mismatch vs reference: max diff {float(jnp.max(diff)):.3e}"

    print("KERNEL_OK")
</pallas_src>

<mosaic_0001>
module attributes {stable_mosaic.version = 11 : i64} {
  func.func @_qmlp_kernel(%arg0: i32, %arg1: memref<32x128xf32, #tpu.memory_space<vmem>>, %arg2: memref<128x128xbf16, #tpu.memory_space<vmem>>, %arg3: memref<1x128xf32, #tpu.memory_space<vmem>>, %arg4: memref<128x128xbf16, #tpu.memory_space<vmem>>, %arg5: memref<1x128xf32, #tpu.memory_space<vmem>>, %arg6: memref<32x128xf32, #tpu.memory_space<vmem>>) attributes {dimension_semantics = [#tpu.dimension_semantics<parallel>], iteration_bounds = array<i64: 1>, scalar_prefetch = 0 : i64, scratch_operands = 0 : i64, tpu.core_type = #tpu.core_type<tc>, window_params = [{transform_indices = @transform_0, window_bounds = array<i64: 32, 128>}, {pipeline_mode = #tpu.pipeline_mode<synchronous>, transform_indices = @transform_1, window_bounds = array<i64: 128, 128>}, {pipeline_mode = #tpu.pipeline_mode<synchronous>, transform_indices = @transform_2, window_bounds = array<i64: 1, 128>}, {pipeline_mode = #tpu.pipeline_mode<synchronous>, transform_indices = @transform_3, window_bounds = array<i64: 128, 128>}, {pipeline_mode = #tpu.pipeline_mode<synchronous>, transform_indices = @transform_4, window_bounds = array<i64: 1, 128>}, {transform_indices = @transform_5, window_bounds = array<i64: 32, 128>}]} {
    %c0 = arith.constant 0 : index
    %c0_0 = arith.constant 0 : index
    %0 = vector.load %arg1[%c0, %c0_0] : memref<32x128xf32, #tpu.memory_space<vmem>>, vector<32x128xf32>
    %1 = arith.truncf %0 : vector<32x128xf32> to vector<32x128xbf16>
    %2 = arith.extf %1 : vector<32x128xbf16> to vector<32x128xf32>
    %3 = arith.subf %0, %2 : vector<32x128xf32>
    %4 = arith.truncf %3 : vector<32x128xf32> to vector<32x128xbf16>
    %c0_1 = arith.constant 0 : index
    %c0_2 = arith.constant 0 : index
    %5 = vector.load %arg2[%c0_1, %c0_2] : memref<128x128xbf16, #tpu.memory_space<vmem>>, vector<128x128xbf16>
    %cst = arith.constant dense<0.000000e+00> : vector<32x128xf32>
    %6 = tpu.matmul %1, %5, %cst {dimension_numbers = #tpu.dot_dimension_numbers<[1], [0], [0], [1], [0, 0, 1, 1], [], []>} : vector<32x128xbf16>, vector<128x128xbf16>, vector<32x128xf32> -> vector<32x128xf32>
    %cst_3 = arith.constant dense<0.000000e+00> : vector<32x128xf32>
    %7 = tpu.matmul %4, %5, %cst_3 {dimension_numbers = #tpu.dot_dimension_numbers<[1], [0], [0], [1], [0, 0, 1, 1], [], []>} : vector<32x128xbf16>, vector<128x128xbf16>, vector<32x128xf32> -> vector<32x128xf32>
    %8 = arith.addf %6, %7 : vector<32x128xf32>
    %cst_4 = arith.constant 0.0666666701 : f32
    %9 = vector.broadcast %cst_4 : f32 to vector<32x128xf32>
    %10 = arith.mulf %8, %9 : vector<32x128xf32>
    %c0_5 = arith.constant 0 : index
    %c0_6 = arith.constant 0 : index
    %11 = vector.load %arg3[%c0_5, %c0_6] : memref<1x128xf32, #tpu.memory_space<vmem>>, vector<1x128xf32>
    %12 = vector.broadcast %11 : vector<1x128xf32> to vector<32x128xf32>
    %13 = arith.addf %10, %12 : vector<32x128xf32>
    %cst_7 = arith.constant 0.000000e+00 : f32
    %14 = vector.broadcast %cst_7 : f32 to vector<32x128xf32>
    %cst_8 = arith.constant 0.0634560063 : f32
    %15 = vector.broadcast %cst_8 : f32 to vector<32x128xf32>
    %16 = arith.cmpf oge, %13, %15 : vector<32x128xf32>
    %cst_9 = arith.constant 1.000000e+00 : f32
    %cst_10 = arith.constant 0.000000e+00 : f32
    %17 = vector.broadcast %cst_9 : f32 to vector<32x128xf32>
    %18 = vector.broadcast %cst_10 : f32 to vector<32x128xf32>
    %19 = arith.select %16, %17, %18 : vector<32x128xi1>, vector<32x128xf32>
    %20 = arith.addf %14, %19 : vector<32x128xf32>
    %cst_11 = arith.constant 0.175539568 : f32
    %21 = vector.broadcast %cst_11 : f32 to vector<32x128xf32>
    %22 = arith.cmpf oge, %13, %21 : vector<32x128xf32>
    %cst_12 = arith.constant 1.000000e+00 : f32
    %cst_13 = arith.constant 0.000000e+00 : f32
    %23 = vector.broadcast %cst_12 : f32 to vector<32x128xf32>
    %24 = vector.broadcast %cst_13 : f32 to vector<32x128xf32>
    %25 = arith.select %22, %23, %24 : vector<32x128xi1>, vector<32x128xf32>
    %26 = arith.addf %20, %25 : vector<32x128xf32>
    %cst_14 = arith.constant 0.274120927 : f32
    %27 = vector.broadcast %cst_14 : f32 to vector<32x128xf32>
    %28 = arith.cmpf oge, %13, %27 : vector<32x128xf32>
    %cst_15 = arith.constant 1.000000e+00 : f32
    %cst_16 = arith.constant 0.000000e+00 : f32
    %29 = vector.broadcast %cst_15 : f32 to vector<32x128xf32>
    %30 = vector.broadcast %cst_16 : f32 to vector<32x128xf32>
    %31 = arith.select %28, %29, %30 : vector<32x128xi1>, vector<32x128xf32>
    %32 = arith.addf %26, %31 : vector<32x128xf32>
    %cst_17 = arith.constant 0.363510787 : f32
    %33 = vector.broadcast %cst_17 : f32 to vector<32x128xf32>
    %34 = arith.cmpf oge, %13, %33 : vector<32x128xf32>
    %cst_18 = arith.constant 1.000000e+00 : f32
    %cst_19 = arith.constant 0.000000e+00 : f32
    %35 = vector.broadcast %cst_18 : f32 to vector<32x128xf32>
    %36 = vector.broadcast %cst_19 : f32 to vector<32x128xf32>
    %37 = arith.select %34, %35, %36 : vector<32x128xi1>, vector<32x128xf32>
    %38 = arith.addf %32, %37 : vector<32x128xf32>
    %cst_20 = arith.constant 0.446237803 : f32
    %39 = vector.broadcast %cst_20 : f32 to vector<32x128xf32>
    %40 = arith.cmpf oge, %13, %39 : vector<32x128xf32>
    %cst_21 = arith.constant 1.000000e+00 : f32
    %cst_22 = arith.constant 0.000000e+00 : f32
    %41 = vector.broadcast %cst_21 : f32 to vector<32x128xf32>
    %42 = vector.broadcast %cst_22 : f32 to vector<32x128xf32>
    %43 = arith.select %40, %41, %42 : vector<32x128xi1>, vector<32x128xf32>
    %44 = arith.addf %38, %43 : vector<32x128xf32>
    %cst_23 = arith.constant 0.523931563 : f32
    %45 = vector.broadcast %cst_23 : f32 to vector<32x128xf32>
    %46 = arith.cmpf oge, %13, %45 : vector<32x128xf32>
    %cst_24 = arith.constant 1.000000e+00 : f32
    %cst_25 = arith.constant 0.000000e+00 : f32
    %47 = vector.broadcast %cst_24 : f32 to vector<32x128xf32>
    %48 = vector.broadcast %cst_25 : f32 to vector<32x128xf32>
    %49 = arith.select %46, %47, %48 : vector<32x128xi1>, vector<32x128xf32>
    %50 = arith.addf %44, %49 : vector<32x128xf32>
    %cst_26 = arith.constant 0.597713888 : f32
    %51 = vector.broadcast %cst_26 : f32 to vector<32x128xf32>
    %52 = arith.cmpf oge, %13, %51 : vector<32x128xf32>
    %cst_27 = arith.constant 1.000000e+00 : f32
    %cst_28 = arith.constant 0.000000e+00 : f32
    %53 = vector.broadcast %cst_27 : f32 to vector<32x128xf32>
    %54 = vector.broadcast %cst_28 : f32 to vector<32x128xf32>
    %55 = arith.select %52, %53, %54 : vector<32x128xi1>, vector<32x128xf32>
    %56 = arith.addf %50, %55 : vector<32x128xf32>
    %cst_29 = arith.constant 6.683960e-01 : f32
    %57 = vector.broadcast %cst_29 : f32 to vector<32x128xf32>
    %58 = arith.cmpf oge, %13, %57 : vector<32x128xf32>
    %cst_30 = arith.constant 1.000000e+00 : f32
    %cst_31 = arith.constant 0.000000e+00 : f32
    %59 = vector.broadcast %cst_30 : f32 to vector<32x128xf32>
    %60 = vector.broadcast %cst_31 : f32 to vector<32x128xf32>
    %61 = arith.select %58, %59, %60 : vector<32x128xi1>, vector<32x128xf32>
    %62 = arith.addf %56, %61 : vector<32x128xf32>
    %cst_32 = arith.constant 0.736587524 : f32
    %63 = vector.broadcast %cst_32 : f32 to vector<32x128xf32>
    %64 = arith.cmpf oge, %13, %63 : vector<32x128xf32>
    %cst_33 = arith.constant 1.000000e+00 : f32
    %cst_34 = arith.constant 0.000000e+00 : f32
    %65 = vector.broadcast %cst_33 : f32 to vector<32x128xf32>
    %66 = vector.broadcast %cst_34 : f32 to vector<32x128xf32>
    %67 = arith.select %64, %65, %66 : vector<32x128xi1>, vector<32x128xf32>
    %68 = arith.addf %62, %67 : vector<32x128xf32>
    %cst_35 = arith.constant 0.802761197 : f32
    %69 = vector.broadcast %cst_35 : f32 to vector<32x128xf32>
    %70 = arith.cmpf oge, %13, %69 : vector<32x128xf32>
    %cst_36 = arith.constant 1.000000e+00 : f32
    %cst_37 = arith.constant 0.000000e+00 : f32
    %71 = vector.broadcast %cst_36 : f32 to vector<32x128xf32>
    %72 = vector.broadcast %cst_37 : f32 to vector<32x128xf32>
    %73 = arith.select %70, %71, %72 : vector<32x128xi1>, vector<32x128xf32>
    %74 = arith.addf %68, %73 : vector<32x128xf32>
    %cst_38 = arith.constant 0.867292821 : f32
    %75 = vector.broadcast %cst_38 : f32 to vector<32x128xf32>
    %76 = arith.cmpf oge, %13, %75 : vector<32x128xf32>
    %cst_39 = arith.constant 1.000000e+00 : f32
    %cst_40 = arith.constant 0.000000e+00 : f32
    %77 = vector.broadcast %cst_39 : f32 to vector<32x128xf32>
    %78 = vector.broadcast %cst_40 : f32 to vector<32x128xf32>
    %79 = arith.select %76, %77, %78 : vector<32x128xi1>, vector<32x128xf32>
    %80 = arith.addf %74, %79 : vector<32x128xf32>
    %cst_41 = arith.constant 0.930487692 : f32
    %81 = vector.broadcast %cst_41 : f32 to vector<32x128xf32>
    %82 = arith.cmpf oge, %13, %81 : vector<32x128xf32>
    %cst_42 = arith.constant 1.000000e+00 : f32
    %cst_43 = arith.constant 0.000000e+00 : f32
    %83 = vector.broadcast %cst_42 : f32 to vector<32x128xf32>
    %84 = vector.broadcast %cst_43 : f32 to vector<32x128xf32>
    %85 = arith.select %82, %83, %84 : vector<32x128xi1>, vector<32x128xf32>
    %86 = arith.addf %80, %85 : vector<32x128xf32>
    %cst_44 = arith.constant 0.992598593 : f32
    %87 = vector.broadcast %cst_44 : f32 to vector<32x128xf32>
    %88 = arith.cmpf oge, %13, %87 : vector<32x128xf32>
    %cst_45 = arith.constant 1.000000e+00 : f32
    %cst_46 = arith.constant 0.000000e+00 : f32
    %89 = vector.broadcast %cst_45 : f32 to vector<32x128xf32>
    %90 = vector.broadcast %cst_46 : f32 to vector<32x128xf32>
    %91 = arith.select %88, %89, %90 : vector<32x128xi1>, vector<32x128xf32>
    %92 = arith.addf %86, %91 : vector<32x128xf32>
    %cst_47 = arith.constant 1.05383778 : f32
    %93 = vector.broadcast %cst_47 : f32 to vector<32x128xf32>
    %94 = arith.cmpf oge, %13, %93 : vector<32x128xf32>
    %cst_48 = arith.constant 1.000000e+00 : f32
    %cst_49 = arith.constant 0.000000e+00 : f32
    %95 = vector.broadcast %cst_48 : f32 to vector<32x128xf32>
    %96 = vector.broadcast %cst_49 : f32 to vector<32x128xf32>
    %97 = arith.select %94, %95, %96 : vector<32x128xi1>, vector<32x128xf32>
    %98 = arith.addf %92, %97 : vector<32x128xf32>
    %cst_50 = arith.constant 1.11438608 : f32
    %99 = vector.broadcast %cst_50 : f32 to vector<32x128xf32>
    %100 = arith.cmpf oge, %13, %99 : vector<32x128xf32>
    %cst_51 = arith.constant 1.000000e+00 : f32
    %cst_52 = arith.constant 0.000000e+00 : f32
    %101 = vector.broadcast %cst_51 : f32 to vector<32x128xf32>
    %102 = vector.broadcast %cst_52 : f32 to vector<32x128xf32>
    %103 = arith.select %100, %101, %102 : vector<32x128xi1>, vector<32x128xf32>
    %104 = arith.addf %98, %103 : vector<32x128xf32>
    %105 = arith.truncf %104 : vector<32x128xf32> to vector<32x128xbf16>
    %c0_53 = arith.constant 0 : index
    %c0_54 = arith.constant 0 : index
    %106 = vector.load %arg4[%c0_53, %c0_54] : memref<128x128xbf16, #tpu.memory_space<vmem>>, vector<128x128xbf16>
    %cst_55 = arith.constant dense<0.000000e+00> : vector<32x128xf32>
    %107 = tpu.matmul %105, %106, %cst_55 {dimension_numbers = #tpu.dot_dimension_numbers<[1], [0], [0], [1], [0, 0, 1, 1], [], []>} : vector<32x128xbf16>, vector<128x128xbf16>, vector<32x128xf32> -> vector<32x128xf32>
    %cst_56 = arith.constant 0.00444444455 : f32
    %108 = vector.broadcast %cst_56 : f32 to vector<32x128xf32>
    %109 = arith.mulf %107, %108 : vector<32x128xf32>
    %c0_57 = arith.constant 0 : index
    %c0_58 = arith.constant 0 : index
    %110 = vector.load %arg5[%c0_57, %c0_58] : memref<1x128xf32, #tpu.memory_space<vmem>>, vector<1x128xf32>
    %111 = vector.broadcast %110 : vector<1x128xf32> to vector<32x128xf32>
    %112 = arith.addf %109, %111 : vector<32x128xf32>
    %c0_59 = arith.constant 0 : index
    %c0_60 = arith.constant 0 : index
    %113 = vector.load %arg6[%c0_59, %c0_60] : memref<32x128xf32, #tpu.memory_space<vmem>>, vector<32x128xf32>
    tpu.vector_store %arg6[%c0_59, %c0_60], %112 {strides = array<i32>} : memref<32x128xf32, #tpu.memory_space<vmem>>, vector<32x128xf32>,
    return
  }
  func.func @transform_0(%arg0: i32) -> (i32, i32) {
    %c0_i32 = arith.constant 0 : i32
    %c0_i32_0 = arith.constant 0 : i32
    return %arg0, %c0_i32 : i32, i32
  }
  func.func @transform_1(%arg0: i32) -> (i32, i32) {
    %c0_i32 = arith.constant 0 : i32
    %c0_i32_0 = arith.constant 0 : i32
    %c0_i32_1 = arith.constant 0 : i32
    return %c0_i32, %c0_i32_0 : i32, i32
  }
  func.func @transform_2(%arg0: i32) -> (i32, i32) {
    %c0_i32 = arith.constant 0 : i32
    %c0_i32_0 = arith.constant 0 : i32
    %c0_i32_1 = arith.constant 0 : i32
    return %c0_i32, %c0_i32_0 : i32, i32
  }
  func.func @transform_3(%arg0: i32) -> (i32, i32) {
    %c0_i32 = arith.constant 0 : i32
    %c0_i32_0 = arith.constant 0 : i32
    %c0_i32_1 = arith.constant 0 : i32
    return %c0_i32, %c0_i32_0 : i32, i32
  }
  func.func @transform_4(%arg0: i32) -> (i32, i32) {
    %c0_i32 = arith.constant 0 : i32
    %c0_i32_0 = arith.constant 0 : i32
    %c0_i32_1 = arith.constant 0 : i32
    return %c0_i32, %c0_i32_0 : i32, i32
  }
  func.func @transform_5(%arg0: i32) -> (i32, i32) {
    %c0_i32 = arith.constant 0 : i32
    %c0_i32_0 = arith.constant 0 : i32
    return %arg0, %c0_i32 : i32, i32
  }
}

module attributes {stable_mosaic.version = 11 : i64} {
  func.func @_qmlp_kernel(%arg0: i32, %arg1: memref<32x128xf32, #tpu.memory_space<vmem>>, %arg2: memref<128x128xbf16, #tpu.memory_space<vmem>>, %arg3: memref<1x128xf32, #tpu.memory_space<vmem>>, %arg4: memref<128x128xbf16, #tpu.memory_space<vmem>>, %arg5: memref<1x128xf32, #tpu.memory_space<vmem>>, %arg6: memref<32x128xf32, #tpu.memory_space<vmem>>) attributes {dimension_semantics = [#tpu.dimension_semantics<parallel>], iteration_bounds = array<i64: 1>, scalar_prefetch = 0 : i64, scratch_operands = 0 : i64, tpu.core_type = #tpu.core_type<tc>, window_params = [{transform_indices = @transform_0, window_bounds = array<i64: 32, 128>}, {pipeline_mode = #tpu.pipeline_mode<synchronous>, transform_indices = @transform_1, window_bounds = array<i64: 128, 128>}, {pipeline_mode = #tpu.pipeline_mode<synchronous>, transform_indices = @transform_2, window_bounds = array<i64: 1, 128>}, {pipeline_mode = #tpu.pipeline_mode<synchronous>, transform_indices = @transform_3, window_bounds = array<i64: 128, 128>}, {pipeline_mode = #tpu.pipeline_mode<synchronous>, transform_indices = @transform_4, window_bounds = array<i64: 1, 128>}, {transform_indices = @transform_5, window_bounds = array<i64: 32, 128>}]} {
    %c0 = arith.constant 0 : index
    %c0_0 = arith.constant 0 : index
    %0 = vector.load %arg1[%c0, %c0_0] : memref<32x128xf32, #tpu.memory_space<vmem>>, vector<32x128xf32>
    %1 = arith.truncf %0 : vector<32x128xf32> to vector<32x128xbf16>
    %2 = arith.extf %1 : vector<32x128xbf16> to vector<32x128xf32>
    %3 = arith.subf %0, %2 : vector<32x128xf32>
    %4 = arith.truncf %3 : vector<32x128xf32> to vector<32x128xbf16>
    %c0_1 = arith.constant 0 : index
    %c0_2 = arith.constant 0 : index
    %5 = vector.load %arg2[%c0_1, %c0_2] : memref<128x128xbf16, #tpu.memory_space<vmem>>, vector<128x128xbf16>
    %cst = arith.constant dense<0.000000e+00> : vector<32x128xf32>
    %6 = tpu.matmul %1, %5, %cst {dimension_numbers = #tpu.dot_dimension_numbers<[1], [0], [0], [1], [0, 0, 1, 1], [], []>} : vector<32x128xbf16>, vector<128x128xbf16>, vector<32x128xf32> -> vector<32x128xf32>
    %cst_3 = arith.constant dense<0.000000e+00> : vector<32x128xf32>
    %7 = tpu.matmul %4, %5, %cst_3 {dimension_numbers = #tpu.dot_dimension_numbers<[1], [0], [0], [1], [0, 0, 1, 1], [], []>} : vector<32x128xbf16>, vector<128x128xbf16>, vector<32x128xf32> -> vector<32x128xf32>
    %8 = arith.addf %6, %7 : vector<32x128xf32>
    %cst_4 = arith.constant 0.0666666701 : f32
    %9 = vector.broadcast %cst_4 : f32 to vector<32x128xf32>
    %10 = arith.mulf %8, %9 : vector<32x128xf32>
    %c0_5 = arith.constant 0 : index
    %c0_6 = arith.constant 0 : index
    %11 = vector.load %arg3[%c0_5, %c0_6] : memref<1x128xf32, #tpu.memory_space<vmem>>, vector<1x128xf32>
    %12 = vector.broadcast %11 : vector<1x128xf32> to vector<32x128xf32>
    %13 = arith.addf %10, %12 : vector<32x128xf32>
    %cst_7 = arith.constant 0.000000e+00 : f32
    %14 = vector.broadcast %cst_7 : f32 to vector<32x128xf32>
    %cst_8 = arith.constant 0.0634560063 : f32
    %15 = vector.broadcast %cst_8 : f32 to vector<32x128xf32>
    %16 = arith.cmpf oge, %13, %15 : vector<32x128xf32>
    %cst_9 = arith.constant 1.000000e+00 : f32
    %cst_10 = arith.constant 0.000000e+00 : f32
    %17 = vector.broadcast %cst_9 : f32 to vector<32x128xf32>
    %18 = vector.broadcast %cst_10 : f32 to vector<32x128xf32>
    %19 = arith.select %16, %17, %18 : vector<32x128xi1>, vector<32x128xf32>
    %20 = arith.addf %14, %19 : vector<32x128xf32>
    %cst_11 = arith.constant 0.175539568 : f32
    %21 = vector.broadcast %cst_11 : f32 to vector<32x128xf32>
    %22 = arith.cmpf oge, %13, %21 : vector<32x128xf32>
    %cst_12 = arith.constant 1.000000e+00 : f32
    %cst_13 = arith.constant 0.000000e+00 : f32
    %23 = vector.broadcast %cst_12 : f32 to vector<32x128xf32>
    %24 = vector.broadcast %cst_13 : f32 to vector<32x128xf32>
    %25 = arith.select %22, %23, %24 : vector<32x128xi1>, vector<32x128xf32>
    %26 = arith.addf %20, %25 : vector<32x128xf32>
    %cst_14 = arith.constant 0.274120927 : f32
    %27 = vector.broadcast %cst_14 : f32 to vector<32x128xf32>
    %28 = arith.cmpf oge, %13, %27 : vector<32x128xf32>
    %cst_15 = arith.constant 1.000000e+00 : f32
    %cst_16 = arith.constant 0.000000e+00 : f32
    %29 = vector.broadcast %cst_15 : f32 to vector<32x128xf32>
    %30 = vector.broadcast %cst_16 : f32 to vector<32x128xf32>
    %31 = arith.select %28, %29, %30 : vector<32x128xi1>, vector<32x128xf32>
    %32 = arith.addf %26, %31 : vector<32x128xf32>
    %cst_17 = arith.constant 0.363510787 : f32
    %33 = vector.broadcast %cst_17 : f32 to vector<32x128xf32>
    %34 = arith.cmpf oge, %13, %33 : vector<32x128xf32>
    %cst_18 = arith.constant 1.000000e+00 : f32
    %cst_19 = arith.constant 0.000000e+00 : f32
    %35 = vector.broadcast %cst_18 : f32 to vector<32x128xf32>
    %36 = vector.broadcast %cst_19 : f32 to vector<32x128xf32>
    %37 = arith.select %34, %35, %36 : vector<32x128xi1>, vector<32x128xf32>
    %38 = arith.addf %32, %37 : vector<32x128xf32>
    %cst_20 = arith.constant 0.446237803 : f32
    %39 = vector.broadcast %cst_20 : f32 to vector<32x128xf32>
    %40 = arith.cmpf oge, %13, %39 : vector<32x128xf32>
    %cst_21 = arith.constant 1.000000e+00 : f32
    %cst_22 = arith.constant 0.000000e+00 : f32
    %41 = vector.broadcast %cst_21 : f32 to vector<32x128xf32>
    %42 = vector.broadcast %cst_22 : f32 to vector<32x128xf32>
    %43 = arith.select %40, %41, %42 : vector<32x128xi1>, vector<32x128xf32>
    %44 = arith.addf %38, %43 : vector<32x128xf32>
    %cst_23 = arith.constant 0.523931563 : f32
    %45 = vector.broadcast %cst_23 : f32 to vector<32x128xf32>
    %46 = arith.cmpf oge, %13, %45 : vector<32x128xf32>
    %cst_24 = arith.constant 1.000000e+00 : f32
    %cst_25 = arith.constant 0.000000e+00 : f32
    %47 = vector.broadcast %cst_24 : f32 to vector<32x128xf32>
    %48 = vector.broadcast %cst_25 : f32 to vector<32x128xf32>
    %49 = arith.select %46, %47, %48 : vector<32x128xi1>, vector<32x128xf32>
    %50 = arith.addf %44, %49 : vector<32x128xf32>
    %cst_26 = arith.constant 0.597713888 : f32
    %51 = vector.broadcast %cst_26 : f32 to vector<32x128xf32>
    %52 = arith.cmpf oge, %13, %51 : vector<32x128xf32>
    %cst_27 = arith.constant 1.000000e+00 : f32
    %cst_28 = arith.constant 0.000000e+00 : f32
    %53 = vector.broadcast %cst_27 : f32 to vector<32x128xf32>
    %54 = vector.broadcast %cst_28 : f32 to vector<32x128xf32>
    %55 = arith.select %52, %53, %54 : vector<32x128xi1>, vector<32x128xf32>
    %56 = arith.addf %50, %55 : vector<32x128xf32>
    %cst_29 = arith.constant 6.683960e-01 : f32
    %57 = vector.broadcast %cst_29 : f32 to vector<32x128xf32>
    %58 = arith.cmpf oge, %13, %57 : vector<32x128xf32>
    %cst_30 = arith.constant 1.000000e+00 : f32
    %cst_31 = arith.constant 0.000000e+00 : f32
    %59 = vector.broadcast %cst_30 : f32 to vector<32x128xf32>
    %60 = vector.broadcast %cst_31 : f32 to vector<32x128xf32>
    %61 = arith.select %58, %59, %60 : vector<32x128xi1>, vector<32x128xf32>
    %62 = arith.addf %56, %61 : vector<32x128xf32>
    %cst_32 = arith.constant 0.736587524 : f32
    %63 = vector.broadcast %cst_32 : f32 to vector<32x128xf32>
    %64 = arith.cmpf oge, %13, %63 : vector<32x128xf32>
    %cst_33 = arith.constant 1.000000e+00 : f32
    %cst_34 = arith.constant 0.000000e+00 : f32
    %65 = vector.broadcast %cst_33 : f32 to vector<32x128xf32>
    %66 = vector.broadcast %cst_34 : f32 to vector<32x128xf32>
    %67 = arith.select %64, %65, %66 : vector<32x128xi1>, vector<32x128xf32>
    %68 = arith.addf %62, %67 : vector<32x128xf32>
    %cst_35 = arith.constant 0.802761197 : f32
    %69 = vector.broadcast %cst_35 : f32 to vector<32x128xf32>
    %70 = arith.cmpf oge, %13, %69 : vector<32x128xf32>
    %cst_36 = arith.constant 1.000000e+00 : f32
    %cst_37 = arith.constant 0.000000e+00 : f32
    %71 = vector.broadcast %cst_36 : f32 to vector<32x128xf32>
    %72 = vector.broadcast %cst_37 : f32 to vector<32x128xf32>
    %73 = arith.select %70, %71, %72 : vector<32x128xi1>, vector<32x128xf32>
    %74 = arith.addf %68, %73 : vector<32x128xf32>
    %cst_38 = arith.constant 0.867292821 : f32
    %75 = vector.broadcast %cst_38 : f32 to vector<32x128xf32>
    %76 = arith.cmpf oge, %13, %75 : vector<32x128xf32>
    %cst_39 = arith.constant 1.000000e+00 : f32
    %cst_40 = arith.constant 0.000000e+00 : f32
    %77 = vector.broadcast %cst_39 : f32 to vector<32x128xf32>
    %78 = vector.broadcast %cst_40 : f32 to vector<32x128xf32>
    %79 = arith.select %76, %77, %78 : vector<32x128xi1>, vector<32x128xf32>
    %80 = arith.addf %74, %79 : vector<32x128xf32>
    %cst_41 = arith.constant 0.930487692 : f32
    %81 = vector.broadcast %cst_41 : f32 to vector<32x128xf32>
    %82 = arith.cmpf oge, %13, %81 : vector<32x128xf32>
    %cst_42 = arith.constant 1.000000e+00 : f32
    %cst_43 = arith.constant 0.000000e+00 : f32
    %83 = vector.broadcast %cst_42 : f32 to vector<32x128xf32>
    %84 = vector.broadcast %cst_43 : f32 to vector<32x128xf32>
    %85 = arith.select %82, %83, %84 : vector<32x128xi1>, vector<32x128xf32>
    %86 = arith.addf %80, %85 : vector<32x128xf32>
    %cst_44 = arith.constant 0.992598593 : f32
    %87 = vector.broadcast %cst_44 : f32 to vector<32x128xf32>
    %88 = arith.cmpf oge, %13, %87 : vector<32x128xf32>
    %cst_45 = arith.constant 1.000000e+00 : f32
    %cst_46 = arith.constant 0.000000e+00 : f32
    %89 = vector.broadcast %cst_45 : f32 to vector<32x128xf32>
    %90 = vector.broadcast %cst_46 : f32 to vector<32x128xf32>
    %91 = arith.select %88, %89, %90 : vector<32x128xi1>, vector<32x128xf32>
    %92 = arith.addf %86, %91 : vector<32x128xf32>
    %cst_47 = arith.constant 1.05383778 : f32
    %93 = vector.broadcast %cst_47 : f32 to vector<32x128xf32>
    %94 = arith.cmpf oge, %13, %93 : vector<32x128xf32>
    %cst_48 = arith.constant 1.000000e+00 : f32
    %cst_49 = arith.constant 0.000000e+00 : f32
    %95 = vector.broadcast %cst_48 : f32 to vector<32x128xf32>
    %96 = vector.broadcast %cst_49 : f32 to vector<32x128xf32>
    %97 = arith.select %94, %95, %96 : vector<32x128xi1>, vector<32x128xf32>
    %98 = arith.addf %92, %97 : vector<32x128xf32>
    %cst_50 = arith.constant 1.11438608 : f32
    %99 = vector.broadcast %cst_50 : f32 to vector<32x128xf32>
    %100 = arith.cmpf oge, %13, %99 : vector<32x128xf32>
    %cst_51 = arith.constant 1.000000e+00 : f32
    %cst_52 = arith.constant 0.000000e+00 : f32
    %101 = vector.broadcast %cst_51 : f32 to vector<32x128xf32>
    %102 = vector.broadcast %cst_52 : f32 to vector<32x128xf32>
    %103 = arith.select %100, %101, %102 : vector<32x128xi1>, vector<32x128xf32>
    %104 = arith.addf %98, %103 : vector<32x128xf32>
    %105 = arith.truncf %104 : vector<32x128xf32> to vector<32x128xbf16>
    %c0_53 = arith.constant 0 : index
    %c0_54 = arith.constant 0 : index
    %106 = vector.load %arg4[%c0_53, %c0_54] : memref<128x128xbf16, #tpu.memory_space<vmem>>, vector<128x128xbf16>
    %cst_55 = arith.constant dense<0.000000e+00> : vector<32x128xf32>
    %107 = tpu.matmul %105, %106, %cst_55 {dimension_numbers = #tpu.dot_dimension_numbers<[1], [0], [0], [1], [0, 0, 1, 1], [], []>} : vector<32x128xbf16>, vector<128x128xbf16>, vector<32x128xf32> -> vector<32x128xf32>
    %cst_56 = arith.constant 0.00444444455 : f32
    %108 = vector.broadcast %cst_56 : f32 to vector<32x128xf32>
    %109 = arith.mulf %107, %108 : vector<32x128xf32>
    %c0_57 = arith.constant 0 : index
    %c0_58 = arith.constant 0 : index
    %110 = vector.load %arg5[%c0_57, %c0_58] : memref<1x128xf32, #tpu.memory_space<vmem>>, vector<1x128xf32>
    %111 = vector.broadcast %110 : vector<1x128xf32> to vector<32x128xf32>
    %112 = arith.addf %109, %111 : vector<32x128xf32>
    %c0_59 = arith.constant 0 : index
    %c0_60 = arith.constant 0 : index
    %113 = vector.load %arg6[%c0_59, %c0_60] : memref<32x128xf32, #tpu.memory_space<vmem>>, vector<32x128xf32>
    tpu.vector_store %arg6[%c0_59, %c0_60], %112 {strides = array<i32>} : memref<32x128xf32, #tpu.memory_space<vmem>>, vector<32x128xf32>,
    return
  }
  func.func @transform_0(%arg0: i32) -> (i32, i32) {
    %c0_i32 = arith.constant 0 : i32
    %c0_i32_0 = arith.constant 0 : i32
    return %arg0, %c0_i32 : i32, i32
  }
  func.func @transform_1(%arg0: i32) -> (i32, i32) {
    %c0_i32 = arith.constant 0 : i32
    %c0_i32_0 = arith.constant 0 : i32
    %c0_i32_1 = arith.constant 0 : i32
    return %c0_i32, %c0_i32_0 : i32, i32
  }
  func.func @transform_2(%arg0: i32) -> (i32, i32) {
    %c0_i32 = arith.constant 0 : i32
    %c0_i32_0 = arith.constant 0 : i32
    %c0_i32_1 = arith.constant 0 : i32
    return %c0_i32, %c0_i32_0 : i32, i32
  }
  func.func @transform_3(%arg0: i32) -> (i32, i32) {
    %c0_i32 = arith.constant 0 : i32
    %c0_i32_0 = arith.constant 0 : i32
    %c0_i32_1 = arith.constant 0 : i32
    return %c0_i32, %c0_i32_0 : i32, i32
  }
  func.func @transform_4(%arg0: i32) -> (i32, i32) {
    %c0_i32 = arith.constant 0 : i32
    %c0_i32_0 = arith.constant 0 : i32
    %c0_i32_1 = arith.constant 0 : i32
    return %c0_i32, %c0_i32_0 : i32, i32
  }
  func.func @transform_5(%arg0: i32) -> (i32, i32) {
    %c0_i32 = arith.constant 0 : i32
    %c0_i32_0 = arith.constant 0 : i32
    return %arg0, %c0_i32 : i32, i32
  }
}

</mosaic_0001>

<llo_original>
// kernel: tpu_custom_call.1
$region0: #{tpu_custom_call.1}
  #allocation0 [shape = 'u32[]', space=smem, size = 0x4, offset = 0x4, fixed_abs, tag = 'smem constant byte address 0x4 - core index']
  #allocation1 [shape = 'u32[144,128]{1,0:T(1,128)}', space=vmem, size = 0x12000, scoped, tag = 'internal scratch']
  %s0 = inlined_call_operand.hbm [shape: f32[32,128], index: 0, kind: input, shape index: {}]
  %s1 = inlined_call_operand.hbm [shape: bf16[128,128], index: 1, kind: input, shape index: {}]
  %s2 = inlined_call_operand.vmem [shape: f32[1,128], index: 2, kind: input, shape index: {}]
  %s3 = inlined_call_operand.hbm [shape: bf16[128,128], index: 3, kind: input, shape index: {}]
  %s4 = inlined_call_operand.vmem [shape: f32[1,128], index: 4, kind: input, shape index: {}]
  %s5 = inlined_call_operand.hbm [shape: f32[32,128], index: 5, kind: output, shape index: {}]
  %s6 = sld [smem:[#allocation0]]
  $region42: #{tpu_custom_call.1} parent=0
    _
  %s8 = ssub.s32 1, %s6
  %s9 = scalar_select 0, %s8, %s6
  $region1: #{tpu_custom_call.1} parent=0
    #allocation2 [shape = 'u8[16384]{0}', space=vmem, size = 0x4000, scoped, tag = 'input window, operand 0, single buffered']
    #allocation3 [shape = 's32[1]{0}', space=sflag, size = 0x4, scoped, tag = 'scoped memory for tpu_custom_call.1']
    #allocation4 [shape = 's32[1]{0}', space=sflag, size = 0x4, scoped, tag = 'scoped memory for tpu_custom_call.1']
    #allocation5 [shape = 'u8[32768]{0}', space=vmem, size = 0x8000, scoped, tag = 'input window, operand 1, single buffered']
    #allocation6 [shape = 's32[1]{0}', space=sflag, size = 0x4, scoped, tag = 'scoped memory for tpu_custom_call.1']
    #allocation7 [shape = 'u8[32768]{0}', space=vmem, size = 0x8000, scoped, tag = 'input window, operand 3, single buffered']
    #allocation8 [shape = 'u8[16384]{0}', space=vmem, size = 0x4000, scoped, tag = 'output window, operand 0, single buffered']
    %10 = vsyncpa [#allocation3], 0
    %11 = vsyncpa [#allocation6], 0
    %12 = vsyncpa [#allocation4], 0
    // Predicated region
    $region2: #{tpu_custom_call.1} parent=1 // pred_check
      _
    $region3: #{tpu_custom_call.1} parent=1 // pred_check_branch
      %14 = sbr.rel (0) target = $region5
    $region4: #{tpu_custom_call.1} parent=1 // pred_region
      %s16 = ssub.s32 512, 512
      %17 = vsyncadd [#allocation3], %s16
      %s18 = sshll.u32 [#allocation2], 4
      %s19 = int_to_ptr.vmem [resolvable:$true] %s18
      %24 = dma.hbm_to_vmem [thread:$0]  %s0, 512, %s19, [#allocation3], 128, 128, 8
    $region5: #{tpu_custom_call.1} parent=1 // pred_fallthru
      _
    // Predicated region
    $region6: #{tpu_custom_call.1} parent=1 // pred_check
      _
    $region7: #{tpu_custom_call.1} parent=1 // pred_check_branch
      %26 = sbr.rel (0) target = $region9
    $region8: #{tpu_custom_call.1} parent=1 // pred_region
      %s28 = ssub.s32 1024, 1024
      %29 = vsyncadd [#allocation6], %s28
      %s30 = sshll.u32 [#allocation5], 4
      %s31 = int_to_ptr.vmem [resolvable:$true] %s30
      %36 = dma.hbm_to_vmem [thread:$0]  %s1, 1024, %s31, [#allocation6], 64, 64, 4
    $region9: #{tpu_custom_call.1} parent=1 // pred_fallthru
      _
    // Predicated region
    $region10: #{tpu_custom_call.1} parent=1 // pred_check
      _
    $region11: #{tpu_custom_call.1} parent=1 // pred_check_branch
      %38 = sbr.rel (0) target = $region13
    $region12: #{tpu_custom_call.1} parent=1 // pred_region
      _
    $region13: #{tpu_custom_call.1} parent=1 // pred_fallthru
      _
    // Predicated region
    $region14: #{tpu_custom_call.1} parent=1 // pred_check
      _
    $region15: #{tpu_custom_call.1} parent=1 // pred_check_branch
      %40 = sbr.rel (0) target = $region17
    $region16: #{tpu_custom_call.1} parent=1 // pred_region
      %s42 = ssub.s32 1024, 1024
      %43 = vsyncadd [#allocation6], %s42
      %s44 = sshll.u32 [#allocation7], 4
      %s45 = int_to_ptr.vmem [resolvable:$true] %s44
      %50 = dma.hbm_to_vmem [thread:$0]  %s3, 1024, %s45, [#allocation6], 64, 64, 4
    $region17: #{tpu_custom_call.1} parent=1 // pred_fallthru
      _
    // Predicated region
    $region18: #{tpu_custom_call.1} parent=1 // pred_check
      _
    $region19: #{tpu_custom_call.1} parent=1 // pred_check_branch
      %52 = sbr.rel (0) target = $region21
    $region20: #{tpu_custom_call.1} parent=1 // pred_region
      _
    $region21: #{tpu_custom_call.1} parent=1 // pred_fallthru
      _
    // Predicated region
    $region22: #{tpu_custom_call.1} parent=1 // pred_check
      _
    $region23: #{tpu_custom_call.1} parent=1 // pred_check_branch
      %54 = sbr.rel (0) target = $region25
    $region24: #{tpu_custom_call.1} parent=1 // pred_region
      %55 = dma.done [#allocation3], 512
    $region25: #{tpu_custom_call.1} parent=1 // pred_fallthru
      _
    // Predicated region
    $region26: #{tpu_custom_call.1} parent=1 // pred_check
      _
    $region27: #{tpu_custom_call.1} parent=1 // pred_check_branch
      %57 = sbr.rel (0) target = $region29
    $region28: #{tpu_custom_call.1} parent=1 // pred_region
      %58 = dma.done [#allocation6], 1024
    $region29: #{tpu_custom_call.1} parent=1 // pred_fallthru
      _
    // Predicated region
    $region30: #{tpu_custom_call.1} parent=1 // pred_check
      _
    $region31: #{tpu_custom_call.1} parent=1 // pred_check_branch
      %60 = sbr.rel (0) target = $region33
    $region32: #{tpu_custom_call.1} parent=1 // pred_region
      %61 = dma.done [#allocation6], 1024
    $region33: #{tpu_custom_call.1} parent=1 // pred_fallthru
      _
    %v63 = vld [vmem:[#allocation2] sm:$0xff]
    %v64 = vld [vmem:[#allocation2 + $0x8] sm:$0xff]
    %v65 = vld [vmem:[#allocation2 + $0x10] sm:$0xff]
    %v66 = vld [vmem:[#allocation2 + $0x18] sm:$0xff]
    %v67 = vpack.c.bf16 %v64, %v63
    %v68 = vpack.c.bf16 %v66, %v65
    %v69 = vunpack.c.l.bf16 %v67
    %v70 = vunpack.c.h.bf16 %v67
    %v71 = vunpack.c.l.bf16 %v68
    %v72 = vunpack.c.h.bf16 %v68
    %v73 = vsub.f32 %v63, %v69
    %v74 = vsub.f32 %v64, %v70
    %v75 = vsub.f32 %v65, %v71
    %v76 = vsub.f32 %v66, %v72
    %v77 = vpack.c.bf16 %v74, %v73
    %v78 = vpack.c.bf16 %v76, %v75
    %v79 = vld [vmem:[#allocation5] sm:$0xf]
    %v80 = vld [vmem:[#allocation5 + $0x4] sm:$0xf]
    %v81 = vld [vmem:[#allocation5 + $0x8] sm:$0xf]
    %v82 = vld [vmem:[#allocation5 + $0xc] sm:$0xf]
    %v83 = vld [vmem:[#allocation5 + $0x10] sm:$0xf]
    %v84 = vld [vmem:[#allocation5 + $0x14] sm:$0xf]
    %v85 = vld [vmem:[#allocation5 + $0x18] sm:$0xf]
    %v86 = vld [vmem:[#allocation5 + $0x1c] sm:$0xf]
    %v87 = vld [vmem:[#allocation5 + $0x20] sm:$0xf]
    %v88 = vld [vmem:[#allocation5 + $0x24] sm:$0xf]
    %v89 = vld [vmem:[#allocation5 + $0x28] sm:$0xf]
    %v90 = vld [vmem:[#allocation5 + $0x2c] sm:$0xf]
    %v91 = vld [vmem:[#allocation5 + $0x30] sm:$0xf]
    %v92 = vld [vmem:[#allocation5 + $0x34] sm:$0xf]
    %v93 = vld [vmem:[#allocation5 + $0x38] sm:$0xf]
    %v94 = vld [vmem:[#allocation5 + $0x3c] sm:$0xf]
    %v111 = vunpack.c.l.b16 %v79
    %v112 = vunpack.c.l.b16 %v80
    %v113 = vunpack.c.l.b16 %v81
    %v114 = vunpack.c.l.b16 %v82
    %v115 = vunpack.c.l.b16 %v83
    %v116 = vunpack.c.l.b16 %v84
    %v117 = vunpack.c.l.b16 %v85
    %v118 = vunpack.c.l.b16 %v86
    %v119 = vunpack.c.l.b16 %v87
    %v120 = vunpack.c.l.b16 %v88
    %v121 = vunpack.c.l.b16 %v89
    %v122 = vunpack.c.l.b16 %v90
    %v123 = vunpack.c.l.b16 %v91
    %v124 = vunpack.c.l.b16 %v92
    %v125 = vunpack.c.l.b16 %v93
    %v126 = vunpack.c.l.b16 %v94
    %v127 = vpack.c.b16 %v112, %v111
    %v128 = vpack.c.b16 %v114, %v113
    %v129 = vpack.c.b16 %v116, %v115
    %v130 = vpack.c.b16 %v118, %v117
    %v131 = vpack.c.b16 %v120, %v119
    %v132 = vpack.c.b16 %v122, %v121
    %v133 = vpack.c.b16 %v124, %v123
    %v134 = vpack.c.b16 %v126, %v125
    %143 = vmatprep.subr.bf16.mxu0 0
    %144 = vmatpush1.bf16.msra.mxu0 %v127
    %145 = vmatprep.subr.bf16.mxu0 0
    %146 = vmatpush1.bf16.msra.mxu0 %v128
    %147 = vmatprep.subr.bf16.mxu0 0
    %148 = vmatpush1.bf16.msra.mxu0 %v129
    %149 = vmatprep.subr.bf16.mxu0 0
    %150 = vmatpush1.bf16.msra.mxu0 %v130
    %151 = vmatprep.subr.bf16.mxu0 0
    %152 = vmatpush1.bf16.msra.mxu0 %v131
    %153 = vmatprep.subr.bf16.mxu0 0
    %154 = vmatpush1.bf16.msra.mxu0 %v132
    %155 = vmatprep.subr.bf16.mxu0 0
    %156 = vmatpush1.bf16.msra.mxu0 %v133
    %157 = vmatprep.subr.bf16.mxu0 0
    %158 = vmatpush1.bf16.msra.mxu0 %v134
    %159 = vmatprep.subr.bf16.mxu0 0
    %160 = vmatpush1.bf16.msra.mxu0 0
    %161 = vmatprep.subr.bf16.mxu0 0
    %162 = vmatpush1.bf16.msra.mxu0 0
    %163 = vmatprep.subr.bf16.mxu0 0
    %164 = vmatpush1.bf16.msra.mxu0 0
    %165 = vmatprep.subr.bf16.mxu0 0
    %166 = vmatpush1.bf16.msra.mxu0 0
    %167 = vmatprep.subr.bf16.mxu0 0
    %168 = vmatpush1.bf16.msra.mxu0 0
    %169 = vmatprep.subr.bf16.mxu0 0
    %170 = vmatpush1.bf16.msra.mxu0 0
    %171 = vmatprep.subr.bf16.mxu0 0
    %172 = vmatpush1.bf16.msra.mxu0 0
    %173 = vmatprep.subr.bf16.mxu0 0
    %174 = vmatpush1.bf16.msra.mxu0 0
    %175 = vmatprep.mubr.bf16.mxu0 0
    %176 = vmatmul.mubr.bf16.gmra.mrb[0].mxu0 %v77
    %v177 = vpop.f32.mrb[0].mxu0
    %v178 = vadd.f32 0.0, %v177
    %v179 = vpop.f32.mrb[0].mxu0
    %v180 = vpop.f32.mrb[0].mxu0
    %v181 = vadd.f32 0.0, %v180
    %v182 = vpop.f32.mrb[0].mxu0
    %183 = vmatprep.mubr.bf16.mxu0 0
    %184 = vmatmul.mubr.bf16.gmra.mrb[0].mxu0 %v78
    %v185 = vpop.f32.mrb[0].mxu0
    %v186 = vadd.f32 0.0, %v185
    %v187 = vpop.f32.mrb[0].mxu0
    %v188 = vpop.f32.mrb[0].mxu0
    %v189 = vadd.f32 0.0, %v188
    %v190 = vpop.f32.mrb[0].mxu0
    %191 = vdwg.mxu0
    %192 = vmatprep.subr.bf16.mxu0 0
    %193 = vmatpush1.bf16.msra.mxu0 %v127
    %194 = vmatprep.subr.bf16.mxu0 0
    %195 = vmatpush1.bf16.msra.mxu0 %v128
    %196 = vmatprep.subr.bf16.mxu0 0
    %197 = vmatpush1.bf16.msra.mxu0 %v129
    %198 = vmatprep.subr.bf16.mxu0 0
    %199 = vmatpush1.bf16.msra.mxu0 %v130
    %200 = vmatprep.subr.bf16.mxu0 0
    %201 = vmatpush1.bf16.msra.mxu0 %v131
    %202 = vmatprep.subr.bf16.mxu0 0
    %203 = vmatpush1.bf16.msra.mxu0 %v132
    %204 = vmatprep.subr.bf16.mxu0 0
    %205 = vmatpush1.bf16.msra.mxu0 %v133
    %206 = vmatprep.subr.bf16.mxu0 0
    %207 = vmatpush1.bf16.msra.mxu0 %v134
    %208 = vmatprep.subr.bf16.mxu0 0
    %209 = vmatpush1.bf16.msra.mxu0 0
    %210 = vmatprep.subr.bf16.mxu0 0
    %211 = vmatpush1.bf16.msra.mxu0 0
    %212 = vmatprep.subr.bf16.mxu0 0
    %213 = vmatpush1.bf16.msra.mxu0 0
    %214 = vmatprep.subr.bf16.mxu0 0
    %215 = vmatpush1.bf16.msra.mxu0 0
    %216 = vmatprep.subr.bf16.mxu0 0
    %217 = vmatpush1.bf16.msra.mxu0 0
    %218 = vmatprep.subr.bf16.mxu0 0
    %219 = vmatpush1.bf16.msra.mxu0 0
    %220 = vmatprep.subr.bf16.mxu0 0
    %221 = vmatpush1.bf16.msra.mxu0 0
    %222 = vmatprep.subr.bf16.mxu0 0
    %223 = vmatpush1.bf16.msra.mxu0 0
    %224 = vmatprep.mubr.bf16.mxu0 0
    %225 = vmatmul.mubr.bf16.gmra.mrb[0].mxu0 %v67
    %v226 = vpop.f32.mrb[0].mxu0
    %v227 = vadd.f32 %v178, %v226
    %v228 = vpop.f32.mrb[0].mxu0
    %v229 = vpop.f32.mrb[0].mxu0
    %v230 = vadd.f32 %v181, %v229
    %v231 = vpop.f32.mrb[0].mxu0
    %232 = vmatprep.mubr.bf16.mxu0 0
    %233 = vmatmul.mubr.bf16.gmra.mrb[0].mxu0 %v68
    %v234 = vpop.f32.mrb[0].mxu0
    %v235 = vadd.f32 %v186, %v234
    %v236 = vpop.f32.mrb[0].mxu0
    %v237 = vpop.f32.mrb[0].mxu0
    %v238 = vadd.f32 %v189, %v237
    %v239 = vpop.f32.mrb[0].mxu0
    %240 = vdwg.mxu0
    %v241 = vmul.f32 %v227, 0.06666667
    %v242 = vmul.f32 %v230, 0.06666667
    %v243 = vmul.f32 %v235, 0.06666667
    %v244 = vmul.f32 %v238, 0.06666667
    %v245 = vld [vmem:[%s2] sm:$0x1]
    %v247 = vlaneseq
    %v248 = vshrl.u32 %v247, 7
    %v249 = vsub.s32 0, %v248
    %v250 = vrot.slane %v245, %v249
    %v252 = vadd.f32 %v241, %v250
    %v253 = vadd.f32 %v242, %v250
    %v254 = vadd.f32 %v243, %v250
    %v255 = vadd.f32 %v244, %v250
    %vm256 = vcmp.ge.f32.partialorder %v252, 0.06345601
    %vm257 = vcmp.ge.f32.partialorder %v253, 0.06345601
    %vm258 = vcmp.ge.f32.partialorder %v254, 0.06345601
    %vm259 = vcmp.ge.f32.partialorder %v255, 0.06345601
    %v260 = vsel %vm256, 1.0, 0.0
    %v261 = vsel %vm257, 1.0, 0.0
    %v262 = vsel %vm258, 1.0, 0.0
    %v263 = vsel %vm259, 1.0, 0.0
    %v264 = vadd.f32 %v260, 0.0
    %v265 = vadd.f32 %v261, 0.0
    %v266 = vadd.f32 %v262, 0.0
    %v267 = vadd.f32 %v263, 0.0
    %vm268 = vcmp.ge.f32.partialorder %v252, 0.17553957
    %vm269 = vcmp.ge.f32.partialorder %v253, 0.17553957
    %vm270 = vcmp.ge.f32.partialorder %v254, 0.17553957
    %vm271 = vcmp.ge.f32.partialorder %v255, 0.17553957
    %v272 = vsel %vm268, 1.0, 0.0
    %v273 = vsel %vm269, 1.0, 0.0
    %v274 = vsel %vm270, 1.0, 0.0
    %v275 = vsel %vm271, 1.0, 0.0
    %v276 = vadd.f32 %v264, %v272
    %v277 = vadd.f32 %v265, %v273
    %v278 = vadd.f32 %v266, %v274
    %v279 = vadd.f32 %v267, %v275
    %vm280 = vcmp.ge.f32.partialorder %v252, 0.27412093
    %vm281 = vcmp.ge.f32.partialorder %v253, 0.27412093
    %vm282 = vcmp.ge.f32.partialorder %v254, 0.27412093
    %vm283 = vcmp.ge.f32.partialorder %v255, 0.27412093
    %v284 = vsel %vm280, 1.0, 0.0
    %v285 = vsel %vm281, 1.0, 0.0
    %v286 = vsel %vm282, 1.0, 0.0
    %v287 = vsel %vm283, 1.0, 0.0
    %v288 = vadd.f32 %v276, %v284
    %v289 = vadd.f32 %v277, %v285
    %v290 = vadd.f32 %v278, %v286
    %v291 = vadd.f32 %v279, %v287
    %vm292 = vcmp.ge.f32.partialorder %v252, 0.3635108
    %vm293 = vcmp.ge.f32.partialorder %v253, 0.3635108
    %vm294 = vcmp.ge.f32.partialorder %v254, 0.3635108
    %vm295 = vcmp.ge.f32.partialorder %v255, 0.3635108
    %v296 = vsel %vm292, 1.0, 0.0
    %v297 = vsel %vm293, 1.0, 0.0
    %v298 = vsel %vm294, 1.0, 0.0
    %v299 = vsel %vm295, 1.0, 0.0
    %v300 = vadd.f32 %v288, %v296
    %v301 = vadd.f32 %v289, %v297
    %v302 = vadd.f32 %v290, %v298
    %v303 = vadd.f32 %v291, %v299
    %vm304 = vcmp.ge.f32.partialorder %v252, 0.4462378
    %vm305 = vcmp.ge.f32.partialorder %v253, 0.4462378
    %vm306 = vcmp.ge.f32.partialorder %v254, 0.4462378
    %vm307 = vcmp.ge.f32.partialorder %v255, 0.4462378
    %v308 = vsel %vm304, 1.0, 0.0
    %v309 = vsel %vm305, 1.0, 0.0
    %v310 = vsel %vm306, 1.0, 0.0
    %v311 = vsel %vm307, 1.0, 0.0
    %v312 = vadd.f32 %v300, %v308
    %v313 = vadd.f32 %v301, %v309
    %v314 = vadd.f32 %v302, %v310
    %v315 = vadd.f32 %v303, %v311
    %vm316 = vcmp.ge.f32.partialorder %v252, 0.52393156
    %vm317 = vcmp.ge.f32.partialorder %v253, 0.52393156
    %vm318 = vcmp.ge.f32.partialorder %v254, 0.52393156
    %vm319 = vcmp.ge.f32.partialorder %v255, 0.52393156
    %v320 = vsel %vm316, 1.0, 0.0
    %v321 = vsel %vm317, 1.0, 0.0
    %v322 = vsel %vm318, 1.0, 0.0
    %v323 = vsel %vm319, 1.0, 0.0
    %v324 = vadd.f32 %v312, %v320
    %v325 = vadd.f32 %v313, %v321
    %v326 = vadd.f32 %v314, %v322
    %v327 = vadd.f32 %v315, %v323
    %vm328 = vcmp.ge.f32.partialorder %v252, 0.5977139
    %vm329 = vcmp.ge.f32.partialorder %v253, 0.5977139
    %vm330 = vcmp.ge.f32.partialorder %v254, 0.5977139
    %vm331 = vcmp.ge.f32.partialorder %v255, 0.5977139
    %v332 = vsel %vm328, 1.0, 0.0
    %v333 = vsel %vm329, 1.0, 0.0
    %v334 = vsel %vm330, 1.0, 0.0
    %v335 = vsel %vm331, 1.0, 0.0
    %v336 = vadd.f32 %v324, %v332
    %v337 = vadd.f32 %v325, %v333
    %v338 = vadd.f32 %v326, %v334
    %v339 = vadd.f32 %v327, %v335
    %vm340 = vcmp.ge.f32.partialorder %v252, 0.668396
    %vm341 = vcmp.ge.f32.partialorder %v253, 0.668396
    %vm342 = vcmp.ge.f32.partialorder %v254, 0.668396
    %vm343 = vcmp.ge.f32.partialorder %v255, 0.668396
    %v344 = vsel %vm340, 1.0, 0.0
    %v345 = vsel %vm341, 1.0, 0.0
    %v346 = vsel %vm342, 1.0, 0.0
    %v347 = vsel %vm343, 1.0, 0.0
    %v348 = vadd.f32 %v336, %v344
    %v349 = vadd.f32 %v337, %v345
    %v350 = vadd.f32 %v338, %v346
    %v351 = vadd.f32 %v339, %v347
    %vm352 = vcmp.ge.f32.partialorder %v252, 0.7365875
    %vm353 = vcmp.ge.f32.partialorder %v253, 0.7365875
    %vm354 = vcmp.ge.f32.partialorder %v254, 0.7365875
    %vm355 = vcmp.ge.f32.partialorder %v255, 0.7365875
    %v356 = vsel %vm352, 1.0, 0.0
    %v357 = vsel %vm353, 1.0, 0.0
    %v358 = vsel %vm354, 1.0, 0.0
    %v359 = vsel %vm355, 1.0, 0.0
    %v360 = vadd.f32 %v348, %v356
    %v361 = vadd.f32 %v349, %v357
    %v362 = vadd.f32 %v350, %v358
    %v363 = vadd.f32 %v351, %v359
    %vm364 = vcmp.ge.f32.partialorder %v252, 0.8027612
    %vm365 = vcmp.ge.f32.partialorder %v253, 0.8027612
    %vm366 = vcmp.ge.f32.partialorder %v254, 0.8027612
    %vm367 = vcmp.ge.f32.partialorder %v255, 0.8027612
    %v368 = vsel %vm364, 1.0, 0.0
    %v369 = vsel %vm365, 1.0, 0.0
    %v370 = vsel %vm366, 1.0, 0.0
    %v371 = vsel %vm367, 1.0, 0.0
    %v372 = vadd.f32 %v360, %v368
    %v373 = vadd.f32 %v361, %v369
    %v374 = vadd.f32 %v362, %v370
    %v375 = vadd.f32 %v363, %v371
    %vm376 = vcmp.ge.f32.partialorder %v252, 0.8672928
    %vm377 = vcmp.ge.f32.partialorder %v253, 0.8672928
    %vm378 = vcmp.ge.f32.partialorder %v254, 0.8672928
    %vm379 = vcmp.ge.f32.partialorder %v255, 0.8672928
    %v380 = vsel %vm376, 1.0, 0.0
    %v381 = vsel %vm377, 1.0, 0.0
    %v382 = vsel %vm378, 1.0, 0.0
    %v383 = vsel %vm379, 1.0, 0.0
    %v384 = vadd.f32 %v372, %v380
    %v385 = vadd.f32 %v373, %v381
    %v386 = vadd.f32 %v374, %v382
    %v387 = vadd.f32 %v375, %v383
    %vm388 = vcmp.ge.f32.partialorder %v252, 0.9304877
    %vm389 = vcmp.ge.f32.partialorder %v253, 0.9304877
    %vm390 = vcmp.ge.f32.partialorder %v254, 0.9304877
    %vm391 = vcmp.ge.f32.partialorder %v255, 0.9304877
    %v392 = vsel %vm388, 1.0, 0.0
    %v393 = vsel %vm389, 1.0, 0.0
    %v394 = vsel %vm390, 1.0, 0.0
    %v395 = vsel %vm391, 1.0, 0.0
    %v396 = vadd.f32 %v384, %v392
    %v397 = vadd.f32 %v385, %v393
    %v398 = vadd.f32 %v386, %v394
    %v399 = vadd.f32 %v387, %v395
    %vm400 = vcmp.ge.f32.partialorder %v252, 0.9925986
    %vm401 = vcmp.ge.f32.partialorder %v253, 0.9925986
    %vm402 = vcmp.ge.f32.partialorder %v254, 0.9925986
    %vm403 = vcmp.ge.f32.partialorder %v255, 0.9925986
    %v404 = vsel %vm400, 1.0, 0.0
    %v405 = vsel %vm401, 1.0, 0.0
    %v406 = vsel %vm402, 1.0, 0.0
    %v407 = vsel %vm403, 1.0, 0.0
    %v408 = vadd.f32 %v396, %v404
    %v409 = vadd.f32 %v397, %v405
    %v410 = vadd.f32 %v398, %v406
    %v411 = vadd.f32 %v399, %v407
    %vm412 = vcmp.ge.f32.partialorder %v252, 1.0538378
    %vm413 = vcmp.ge.f32.partialorder %v253, 1.0538378
    %vm414 = vcmp.ge.f32.partialorder %v254, 1.0538378
    %vm415 = vcmp.ge.f32.partialorder %v255, 1.0538378
    %v416 = vsel %vm412, 1.0, 0.0
    %v417 = vsel %vm413, 1.0, 0.0
    %v418 = vsel %vm414, 1.0, 0.0
    %v419 = vsel %vm415, 1.0, 0.0
    %v420 = vadd.f32 %v408, %v416
    %v421 = vadd.f32 %v409, %v417
    %v422 = vadd.f32 %v410, %v418
    %v423 = vadd.f32 %v411, %v419
    %vm424 = vcmp.ge.f32.partialorder %v252, 1.1143861
    %vm425 = vcmp.ge.f32.partialorder %v253, 1.1143861
    %vm426 = vcmp.ge.f32.partialorder %v254, 1.1143861
    %vm427 = vcmp.ge.f32.partialorder %v255, 1.1143861
    %v428 = vsel %vm424, 1.0, 0.0
    %v429 = vsel %vm425, 1.0, 0.0
    %v430 = vsel %vm426, 1.0, 0.0
    %v431 = vsel %vm427, 1.0, 0.0
    %v432 = vadd.f32 %v420, %v428
    %v433 = vadd.f32 %v421, %v429
    %v434 = vadd.f32 %v422, %v430
    %v435 = vadd.f32 %v423, %v431
    %v436 = vpack.c.bf16 %v433, %v432
    %v437 = vpack.c.bf16 %v435, %v434
    %v438 = vld [vmem:[#allocation7] sm:$0xf]
    %v439 = vld [vmem:[#allocation7 + $0x4] sm:$0xf]
    %v440 = vld [vmem:[#allocation7 + $0x8] sm:$0xf]
    %v441 = vld [vmem:[#allocation7 + $0xc] sm:$0xf]
    %v442 = vld [vmem:[#allocation7 + $0x10] sm:$0xf]
    %v443 = vld [vmem:[#allocation7 + $0x14] sm:$0xf]
    %v444 = vld [vmem:[#allocation7 + $0x18] sm:$0xf]
    %v445 = vld [vmem:[#allocation7 + $0x1c] sm:$0xf]
    %v446 = vld [vmem:[#allocation7 + $0x20] sm:$0xf]
    %v447 = vld [vmem:[#allocation7 + $0x24] sm:$0xf]
    %v448 = vld [vmem:[#allocation7 + $0x28] sm:$0xf]
    %v449 = vld [vmem:[#allocation7 + $0x2c] sm:$0xf]
    %v450 = vld [vmem:[#allocation7 + $0x30] sm:$0xf]
    %v451 = vld [vmem:[#allocation7 + $0x34] sm:$0xf]
    %v452 = vld [vmem:[#allocation7 + $0x38] sm:$0xf]
    %v453 = vld [vmem:[#allocation7 + $0x3c] sm:$0xf]
    %v470 = vunpack.c.l.b16 %v438
    %v471 = vunpack.c.l.b16 %v439
    %v472 = vunpack.c.l.b16 %v440
    %v473 = vunpack.c.l.b16 %v441
    %v474 = vunpack.c.l.b16 %v442
    %v475 = vunpack.c.l.b16 %v443
    %v476 = vunpack.c.l.b16 %v444
    %v477 = vunpack.c.l.b16 %v445
    %v478 = vunpack.c.l.b16 %v446
    %v479 = vunpack.c.l.b16 %v447
    %v480 = vunpack.c.l.b16 %v448
    %v481 = vunpack.c.l.b16 %v449
    %v482 = vunpack.c.l.b16 %v450
    %v483 = vunpack.c.l.b16 %v451
    %v484 = vunpack.c.l.b16 %v452
    %v485 = vunpack.c.l.b16 %v453
    %v486 = vpack.c.b16 %v471, %v470
    %v487 = vpack.c.b16 %v473, %v472
    %v488 = vpack.c.b16 %v475, %v474
    %v489 = vpack.c.b16 %v477, %v476
    %v490 = vpack.c.b16 %v479, %v478
    %v491 = vpack.c.b16 %v481, %v480
    %v492 = vpack.c.b16 %v483, %v482
    %v493 = vpack.c.b16 %v485, %v484
    %502 = vmatprep.subr.bf16.mxu0 0
    %503 = vmatpush1.bf16.msra.mxu0 %v486
    %504 = vmatprep.subr.bf16.mxu0 0
    %505 = vmatpush1.bf16.msra.mxu0 %v487
    %506 = vmatprep.subr.bf16.mxu0 0
    %507 = vmatpush1.bf16.msra.mxu0 %v488
    %508 = vmatprep.subr.bf16.mxu0 0
    %509 = vmatpush1.bf16.msra.mxu0 %v489
    %510 = vmatprep.subr.bf16.mxu0 0
    %511 = vmatpush1.bf16.msra.mxu0 %v490
    %512 = vmatprep.subr.bf16.mxu0 0
    %513 = vmatpush1.bf16.msra.mxu0 %v491
    %514 = vmatprep.subr.bf16.mxu0 0
    %515 = vmatpush1.bf16.msra.mxu0 %v492
    %516 = vmatprep.subr.bf16.mxu0 0
    %517 = vmatpush1.bf16.msra.mxu0 %v493
    %518 = vmatprep.subr.bf16.mxu0 0
    %519 = vmatpush1.bf16.msra.mxu0 0
    %520 = vmatprep.subr.bf16.mxu0 0
    %521 = vmatpush1.bf16.msra.mxu0 0
    %522 = vmatprep.subr.bf16.mxu0 0
    %523 = vmatpush1.bf16.msra.mxu0 0
    %524 = vmatprep.subr.bf16.mxu0 0
    %525 = vmatpush1.bf16.msra.mxu0 0
    %526 = vmatprep.subr.bf16.mxu0 0
    %527 = vmatpush1.bf16.msra.mxu0 0
    %528 = vmatprep.subr.bf16.mxu0 0
    %529 = vmatpush1.bf16.msra.mxu0 0
    %530 = vmatprep.subr.bf16.mxu0 0
    %531 = vmatpush1.bf16.msra.mxu0 0
    %532 = vmatprep.subr.bf16.mxu0 0
    %533 = vmatpush1.bf16.msra.mxu0 0
    %534 = vmatprep.mubr.bf16.mxu0 0
    %535 = vmatmul.mubr.bf16.gmra.mrb[0].mxu0 %v436
    %v536 = vpop.f32.mrb[0].mxu0
    %v537 = vadd.f32 0.0, %v536
    %v538 = vpop.f32.mrb[0].mxu0
    %v539 = vpop.f32.mrb[0].mxu0
    %v540 = vadd.f32 0.0, %v539
    %v541 = vpop.f32.mrb[0].mxu0
    %542 = vmatprep.mubr.bf16.mxu0 0
    %543 = vmatmul.mubr.bf16.gmra.mrb[0].mxu0 %v437
    %v544 = vpop.f32.mrb[0].mxu0
    %v545 = vadd.f32 0.0, %v544
    %v546 = vpop.f32.mrb[0].mxu0
    %v547 = vpop.f32.mrb[0].mxu0
    %v548 = vadd.f32 0.0, %v547
    %v549 = vpop.f32.mrb[0].mxu0
    %550 = vdwg.mxu0
    %v551 = vmul.f32 %v537, 0.0044444446
    %v552 = vmul.f32 %v540, 0.0044444446
    %v553 = vmul.f32 %v545, 0.0044444446
    %v554 = vmul.f32 %v548, 0.0044444446
    %v555 = vld [vmem:[%s4] sm:$0x1]
    %v557 = vlaneseq
    %v558 = vshrl.u32 %v557, 7
    %v559 = vsub.s32 0, %v558
    %v560 = vrot.slane %v555, %v559
    %v562 = vadd.f32 %v551, %v560
    %v563 = vadd.f32 %v552, %v560
    %v564 = vadd.f32 %v553, %v560
    %v565 = vadd.f32 %v554, %v560
    %566 = vst [vmem:[#allocation8] sm:$0xff] %v562
    %567 = vst [vmem:[#allocation8 + $0x8] sm:$0xff] %v563
    %568 = vst [vmem:[#allocation8 + $0x10] sm:$0xff] %v564
    %569 = vst [vmem:[#allocation8 + $0x18] sm:$0xff] %v565
    // Predicated region
    $region34: #{tpu_custom_call.1} parent=1 // pred_check
      _
    $region35: #{tpu_custom_call.1} parent=1 // pred_check_branch
      %571 = sbr.rel (0) target = $region37
    $region36: #{tpu_custom_call.1} parent=1 // pred_region
      %s573 = ssub.s32 512, 512
      %574 = vsyncadd [#allocation4], %s573
      %s575 = sshll.u32 [#allocation8], 4
      %s576 = int_to_ptr.vmem [resolvable:$true] %s575
      %581 = dma.vmem_to_hbm [thread:$0]  %s576, 512, %s5, [#allocation4], 128, 128, 8
    $region37: #{tpu_custom_call.1} parent=1 // pred_fallthru
      _
    // Predicated region
    $region38: #{tpu_custom_call.1} parent=1 // pred_check
      _
    $region39: #{tpu_custom_call.1} parent=1 // pred_check_branch
      %583 = sbr.rel (0) target = $region41
    $region40: #{tpu_custom_call.1} parent=1 // pred_region
      %584 = dma.done [#allocation4], 512
    $region41: #{tpu_custom_call.1} parent=1 // pred_fallthru
      _
    %585 = vsyncpa [#allocation3], 1
    %586 = vsyncpa [#allocation6], 1
    %587 = vsyncpa [#allocation4], 1

// kernel: tpu_custom_call.1
$region0: #{tpu_custom_call.1}
  #allocation0 [shape = 'u32[]', space=smem, size = 0x4, offset = 0x4, fixed_abs, tag = 'smem constant byte address 0x4 - core index']
  #allocation1 [shape = 'u32[144,128]{1,0:T(1,128)}', space=vmem, size = 0x12000, scoped, tag = 'internal scratch']
  %s0 = inlined_call_operand.hbm [shape: f32[32,128], index: 0, kind: input, shape index: {}]
  %s1 = inlined_call_operand.hbm [shape: bf16[128,128], index: 1, kind: input, shape index: {}]
  %s2 = inlined_call_operand.vmem [shape: f32[1,128], index: 2, kind: input, shape index: {}]
  %s3 = inlined_call_operand.hbm [shape: bf16[128,128], index: 3, kind: input, shape index: {}]
  %s4 = inlined_call_operand.vmem [shape: f32[1,128], index: 4, kind: input, shape index: {}]
  %s5 = inlined_call_operand.hbm [shape: f32[32,128], index: 5, kind: output, shape index: {}]
  %s6 = sld [smem:[#allocation0]]
  $region42: #{tpu_custom_call.1} parent=0
    _
  %s8 = ssub.s32 1, %s6
  %s9 = scalar_select 0, %s8, %s6
  $region1: #{tpu_custom_call.1} parent=0
    #allocation2 [shape = 'u8[16384]{0}', space=vmem, size = 0x4000, scoped, tag = 'input window, operand 0, single buffered']
    #allocation3 [shape = 's32[1]{0}', space=sflag, size = 0x4, scoped, tag = 'scoped memory for tpu_custom_call.1']
    #allocation4 [shape = 's32[1]{0}', space=sflag, size = 0x4, scoped, tag = 'scoped memory for tpu_custom_call.1']
    #allocation5 [shape = 'u8[32768]{0}', space=vmem, size = 0x8000, scoped, tag = 'input window, operand 1, single buffered']
    #allocation6 [shape = 's32[1]{0}', space=sflag, size = 0x4, scoped, tag = 'scoped memory for tpu_custom_call.1']
    #allocation7 [shape = 'u8[32768]{0}', space=vmem, size = 0x8000, scoped, tag = 'input window, operand 3, single buffered']
    #allocation8 [shape = 'u8[16384]{0}', space=vmem, size = 0x4000, scoped, tag = 'output window, operand 0, single buffered']
    %10 = vsyncpa [#allocation3], 0
    %11 = vsyncpa [#allocation6], 0
    %12 = vsyncpa [#allocation4], 0
    // Predicated region
    $region2: #{tpu_custom_call.1} parent=1 // pred_check
      _
    $region3: #{tpu_custom_call.1} parent=1 // pred_check_branch
      %14 = sbr.rel (0) target = $region5
    $region4: #{tpu_custom_call.1} parent=1 // pred_region
      %s16 = ssub.s32 512, 512
      %17 = vsyncadd [#allocation3], %s16
      %s18 = sshll.u32 [#allocation2], 4
      %s19 = int_to_ptr.vmem [resolvable:$true] %s18
      %24 = dma.hbm_to_vmem [thread:$0]  %s0, 512, %s19, [#allocation3], 128, 128, 8
    $region5: #{tpu_custom_call.1} parent=1 // pred_fallthru
      _
    // Predicated region
    $region6: #{tpu_custom_call.1} parent=1 // pred_check
      _
    $region7: #{tpu_custom_call.1} parent=1 // pred_check_branch
      %26 = sbr.rel (0) target = $region9
    $region8: #{tpu_custom_call.1} parent=1 // pred_region
      %s28 = ssub.s32 1024, 1024
      %29 = vsyncadd [#allocation6], %s28
      %s30 = sshll.u32 [#allocation5], 4
      %s31 = int_to_ptr.vmem [resolvable:$true] %s30
      %36 = dma.hbm_to_vmem [thread:$0]  %s1, 1024, %s31, [#allocation6], 64, 64, 4
    $region9: #{tpu_custom_call.1} parent=1 // pred_fallthru
      _
    // Predicated region
    $region10: #{tpu_custom_call.1} parent=1 // pred_check
      _
    $region11: #{tpu_custom_call.1} parent=1 // pred_check_branch
      %38 = sbr.rel (0) target = $region13
    $region12: #{tpu_custom_call.1} parent=1 // pred_region
      _
    $region13: #{tpu_custom_call.1} parent=1 // pred_fallthru
      _
    // Predicated region
    $region14: #{tpu_custom_call.1} parent=1 // pred_check
      _
    $region15: #{tpu_custom_call.1} parent=1 // pred_check_branch
      %40 = sbr.rel (0) target = $region17
    $region16: #{tpu_custom_call.1} parent=1 // pred_region
      %s42 = ssub.s32 1024, 1024
      %43 = vsyncadd [#allocation6], %s42
      %s44 = sshll.u32 [#allocation7], 4
      %s45 = int_to_ptr.vmem [resolvable:$true] %s44
      %50 = dma.hbm_to_vmem [thread:$0]  %s3, 1024, %s45, [#allocation6], 64, 64, 4
    $region17: #{tpu_custom_call.1} parent=1 // pred_fallthru
      _
    // Predicated region
    $region18: #{tpu_custom_call.1} parent=1 // pred_check
      _
    $region19: #{tpu_custom_call.1} parent=1 // pred_check_branch
      %52 = sbr.rel (0) target = $region21
    $region20: #{tpu_custom_call.1} parent=1 // pred_region
      _
    $region21: #{tpu_custom_call.1} parent=1 // pred_fallthru
      _
    // Predicated region
    $region22: #{tpu_custom_call.1} parent=1 // pred_check
      _
    $region23: #{tpu_custom_call.1} parent=1 // pred_check_branch
      %54 = sbr.rel (0) target = $region25
    $region24: #{tpu_custom_call.1} parent=1 // pred_region
      %55 = dma.done [#allocation3], 512
    $region25: #{tpu_custom_call.1} parent=1 // pred_fallthru
      _
    // Predicated region
    $region26: #{tpu_custom_call.1} parent=1 // pred_check
      _
    $region27: #{tpu_custom_call.1} parent=1 // pred_check_branch
      %57 = sbr.rel (0) target = $region29
    $region28: #{tpu_custom_call.1} parent=1 // pred_region
      %58 = dma.done [#allocation6], 1024
    $region29: #{tpu_custom_call.1} parent=1 // pred_fallthru
      _
    // Predicated region
    $region30: #{tpu_custom_call.1} parent=1 // pred_check
      _
    $region31: #{tpu_custom_call.1} parent=1 // pred_check_branch
      %60 = sbr.rel (0) target = $region33
    $region32: #{tpu_custom_call.1} parent=1 // pred_region
      %61 = dma.done [#allocation6], 1024
    $region33: #{tpu_custom_call.1} parent=1 // pred_fallthru
      _
    %v63 = vld [vmem:[#allocation2] sm:$0xff]
    %v64 = vld [vmem:[#allocation2 + $0x8] sm:$0xff]
    %v65 = vld [vmem:[#allocation2 + $0x10] sm:$0xff]
    %v66 = vld [vmem:[#allocation2 + $0x18] sm:$0xff]
    %v67 = vpack.c.bf16 %v64, %v63
    %v68 = vpack.c.bf16 %v66, %v65
    %v69 = vunpack.c.l.bf16 %v67
    %v70 = vunpack.c.h.bf16 %v67
    %v71 = vunpack.c.l.bf16 %v68
    %v72 = vunpack.c.h.bf16 %v68
    %v73 = vsub.f32 %v63, %v69
    %v74 = vsub.f32 %v64, %v70
    %v75 = vsub.f32 %v65, %v71
    %v76 = vsub.f32 %v66, %v72
    %v77 = vpack.c.bf16 %v74, %v73
    %v78 = vpack.c.bf16 %v76, %v75
    %v79 = vld [vmem:[#allocation5] sm:$0xf]
    %v80 = vld [vmem:[#allocation5 + $0x4] sm:$0xf]
    %v81 = vld [vmem:[#allocation5 + $0x8] sm:$0xf]
    %v82 = vld [vmem:[#allocation5 + $0xc] sm:$0xf]
    %v83 = vld [vmem:[#allocation5 + $0x10] sm:$0xf]
    %v84 = vld [vmem:[#allocation5 + $0x14] sm:$0xf]
    %v85 = vld [vmem:[#allocation5 + $0x18] sm:$0xf]
    %v86 = vld [vmem:[#allocation5 + $0x1c] sm:$0xf]
    %v87 = vld [vmem:[#allocation5 + $0x20] sm:$0xf]
    %v88 = vld [vmem:[#allocation5 + $0x24] sm:$0xf]
    %v89 = vld [vmem:[#allocation5 + $0x28] sm:$0xf]
    %v90 = vld [vmem:[#allocation5 + $0x2c] sm:$0xf]
    %v91 = vld [vmem:[#allocation5 + $0x30] sm:$0xf]
    %v92 = vld [vmem:[#allocation5 + $0x34] sm:$0xf]
    %v93 = vld [vmem:[#allocation5 + $0x38] sm:$0xf]
    %v94 = vld [vmem:[#allocation5 + $0x3c] sm:$0xf]
    %v111 = vunpack.c.l.b16 %v79
    %v112 = vunpack.c.l.b16 %v80
    %v113 = vunpack.c.l.b16 %v81
    %v114 = vunpack.c.l.b16 %v82
    %v115 = vunpack.c.l.b16 %v83
    %v116 = vunpack.c.l.b16 %v84
    %v117 = vunpack.c.l.b16 %v85
    %v118 = vunpack.c.l.b16 %v86
    %v119 = vunpack.c.l.b16 %v87
    %v120 = vunpack.c.l.b16 %v88
    %v121 = vunpack.c.l.b16 %v89
    %v122 = vunpack.c.l.b16 %v90
    %v123 = vunpack.c.l.b16 %v91
    %v124 = vunpack.c.l.b16 %v92
    %v125 = vunpack.c.l.b16 %v93
    %v126 = vunpack.c.l.b16 %v94
    %v127 = vpack.c.b16 %v112, %v111
    %v128 = vpack.c.b16 %v114, %v113
    %v129 = vpack.c.b16 %v116, %v115
    %v130 = vpack.c.b16 %v118, %v117
    %v131 = vpack.c.b16 %v120, %v119
    %v132 = vpack.c.b16 %v122, %v121
    %v133 = vpack.c.b16 %v124, %v123
    %v134 = vpack.c.b16 %v126, %v125
    %143 = vmatprep.subr.bf16.mxu0 0
    %144 = vmatpush1.bf16.msra.mxu0 %v127
    %145 = vmatprep.subr.bf16.mxu0 0
    %146 = vmatpush1.bf16.msra.mxu0 %v128
    %147 = vmatprep.subr.bf16.mxu0 0
    %148 = vmatpush1.bf16.msra.mxu0 %v129
    %149 = vmatprep.subr.bf16.mxu0 0
    %150 = vmatpush1.bf16.msra.mxu0 %v130
    %151 = vmatprep.subr.bf16.mxu0 0
    %152 = vmatpush1.bf16.msra.mxu0 %v131
    %153 = vmatprep.subr.bf16.mxu0 0
    %154 = vmatpush1.bf16.msra.mxu0 %v132
    %155 = vmatprep.subr.bf16.mxu0 0
    %156 = vmatpush1.bf16.msra.mxu0 %v133
    %157 = vmatprep.subr.bf16.mxu0 0
    %158 = vmatpush1.bf16.msra.mxu0 %v134
    %159 = vmatprep.subr.bf16.mxu0 0
    %160 = vmatpush1.bf16.msra.mxu0 0
    %161 = vmatprep.subr.bf16.mxu0 0
    %162 = vmatpush1.bf16.msra.mxu0 0
    %163 = vmatprep.subr.bf16.mxu0 0
    %164 = vmatpush1.bf16.msra.mxu0 0
    %165 = vmatprep.subr.bf16.mxu0 0
    %166 = vmatpush1.bf16.msra.mxu0 0
    %167 = vmatprep.subr.bf16.mxu0 0
    %168 = vmatpush1.bf16.msra.mxu0 0
    %169 = vmatprep.subr.bf16.mxu0 0
    %170 = vmatpush1.bf16.msra.mxu0 0
    %171 = vmatprep.subr.bf16.mxu0 0
    %172 = vmatpush1.bf16.msra.mxu0 0
    %173 = vmatprep.subr.bf16.mxu0 0
    %174 = vmatpush1.bf16.msra.mxu0 0
    %175 = vmatprep.mubr.bf16.mxu0 0
    %176 = vmatmul.mubr.bf16.gmra.mrb[0].mxu0 %v77
    %v177 = vpop.f32.mrb[0].mxu0
    %v178 = vadd.f32 0.0, %v177
    %v179 = vpop.f32.mrb[0].mxu0
    %v180 = vpop.f32.mrb[0].mxu0
    %v181 = vadd.f32 0.0, %v180
    %v182 = vpop.f32.mrb[0].mxu0
    %183 = vmatprep.mubr.bf16.mxu0 0
    %184 = vmatmul.mubr.bf16.gmra.mrb[0].mxu0 %v78
    %v185 = vpop.f32.mrb[0].mxu0
    %v186 = vadd.f32 0.0, %v185
    %v187 = vpop.f32.mrb[0].mxu0
    %v188 = vpop.f32.mrb[0].mxu0
    %v189 = vadd.f32 0.0, %v188
    %v190 = vpop.f32.mrb[0].mxu0
    %191 = vdwg.mxu0
    %192 = vmatprep.subr.bf16.mxu0 0
    %193 = vmatpush1.bf16.msra.mxu0 %v127
    %194 = vmatprep.subr.bf16.mxu0 0
    %195 = vmatpush1.bf16.msra.mxu0 %v128
    %196 = vmatprep.subr.bf16.mxu0 0
    %197 = vmatpush1.bf16.msra.mxu0 %v129
    %198 = vmatprep.subr.bf16.mxu0 0
    %199 = vmatpush1.bf16.msra.mxu0 %v130
    %200 = vmatprep.subr.bf16.mxu0 0
    %201 = vmatpush1.bf16.msra.mxu0 %v131
    %202 = vmatprep.subr.bf16.mxu0 0
    %203 = vmatpush1.bf16.msra.mxu0 %v132
    %204 = vmatprep.subr.bf16.mxu0 0
    %205 = vmatpush1.bf16.msra.mxu0 %v133
    %206 = vmatprep.subr.bf16.mxu0 0
    %207 = vmatpush1.bf16.msra.mxu0 %v134
    %208 = vmatprep.subr.bf16.mxu0 0
    %209 = vmatpush1.bf16.msra.mxu0 0
    %210 = vmatprep.subr.bf16.mxu0 0
    %211 = vmatpush1.bf16.msra.mxu0 0
    %212 = vmatprep.subr.bf16.mxu0 0
    %213 = vmatpush1.bf16.msra.mxu0 0
    %214 = vmatprep.subr.bf16.mxu0 0
    %215 = vmatpush1.bf16.msra.mxu0 0
    %216 = vmatprep.subr.bf16.mxu0 0
    %217 = vmatpush1.bf16.msra.mxu0 0
    %218 = vmatprep.subr.bf16.mxu0 0
    %219 = vmatpush1.bf16.msra.mxu0 0
    %220 = vmatprep.subr.bf16.mxu0 0
    %221 = vmatpush1.bf16.msra.mxu0 0
    %222 = vmatprep.subr.bf16.mxu0 0
    %223 = vmatpush1.bf16.msra.mxu0 0
    %224 = vmatprep.mubr.bf16.mxu0 0
    %225 = vmatmul.mubr.bf16.gmra.mrb[0].mxu0 %v67
    %v226 = vpop.f32.mrb[0].mxu0
    %v227 = vadd.f32 %v178, %v226
    %v228 = vpop.f32.mrb[0].mxu0
    %v229 = vpop.f32.mrb[0].mxu0
    %v230 = vadd.f32 %v181, %v229
    %v231 = vpop.f32.mrb[0].mxu0
    %232 = vmatprep.mubr.bf16.mxu0 0
    %233 = vmatmul.mubr.bf16.gmra.mrb[0].mxu0 %v68
    %v234 = vpop.f32.mrb[0].mxu0
    %v235 = vadd.f32 %v186, %v234
    %v236 = vpop.f32.mrb[0].mxu0
    %v237 = vpop.f32.mrb[0].mxu0
    %v238 = vadd.f32 %v189, %v237
    %v239 = vpop.f32.mrb[0].mxu0
    %240 = vdwg.mxu0
    %v241 = vmul.f32 %v227, 0.06666667
    %v242 = vmul.f32 %v230, 0.06666667
    %v243 = vmul.f32 %v235, 0.06666667
    %v244 = vmul.f32 %v238, 0.06666667
    %v245 = vld [vmem:[%s2] sm:$0x1]
    %v247 = vlaneseq
    %v248 = vshrl.u32 %v247, 7
    %v249 = vsub.s32 0, %v248
    %v250 = vrot.slane %v245, %v249
    %v252 = vadd.f32 %v241, %v250
    %v253 = vadd.f32 %v242, %v250
    %v254 = vadd.f32 %v243, %v250
    %v255 = vadd.f32 %v244, %v250
    %vm256 = vcmp.ge.f32.partialorder %v252, 0.06345601
    %vm257 = vcmp.ge.f32.partialorder %v253, 0.06345601
    %vm258 = vcmp.ge.f32.partialorder %v254, 0.06345601
    %vm259 = vcmp.ge.f32.partialorder %v255, 0.06345601
    %v260 = vsel %vm256, 1.0, 0.0
    %v261 = vsel %vm257, 1.0, 0.0
    %v262 = vsel %vm258, 1.0, 0.0
    %v263 = vsel %vm259, 1.0, 0.0
    %v264 = vadd.f32 %v260, 0.0
    %v265 = vadd.f32 %v261, 0.0
    %v266 = vadd.f32 %v262, 0.0
    %v267 = vadd.f32 %v263, 0.0
    %vm268 = vcmp.ge.f32.partialorder %v252, 0.17553957
    %vm269 = vcmp.ge.f32.partialorder %v253, 0.17553957
    %vm270 = vcmp.ge.f32.partialorder %v254, 0.17553957
    %vm271 = vcmp.ge.f32.partialorder %v255, 0.17553957
    %v272 = vsel %vm268, 1.0, 0.0
    %v273 = vsel %vm269, 1.0, 0.0
    %v274 = vsel %vm270, 1.0, 0.0
    %v275 = vsel %vm271, 1.0, 0.0
    %v276 = vadd.f32 %v264, %v272
    %v277 = vadd.f32 %v265, %v273
    %v278 = vadd.f32 %v266, %v274
    %v279 = vadd.f32 %v267, %v275
    %vm280 = vcmp.ge.f32.partialorder %v252, 0.27412093
    %vm281 = vcmp.ge.f32.partialorder %v253, 0.27412093
    %vm282 = vcmp.ge.f32.partialorder %v254, 0.27412093
    %vm283 = vcmp.ge.f32.partialorder %v255, 0.27412093
    %v284 = vsel %vm280, 1.0, 0.0
    %v285 = vsel %vm281, 1.0, 0.0
    %v286 = vsel %vm282, 1.0, 0.0
    %v287 = vsel %vm283, 1.0, 0.0
    %v288 = vadd.f32 %v276, %v284
    %v289 = vadd.f32 %v277, %v285
    %v290 = vadd.f32 %v278, %v286
    %v291 = vadd.f32 %v279, %v287
    %vm292 = vcmp.ge.f32.partialorder %v252, 0.3635108
    %vm293 = vcmp.ge.f32.partialorder %v253, 0.3635108
    %vm294 = vcmp.ge.f32.partialorder %v254, 0.3635108
    %vm295 = vcmp.ge.f32.partialorder %v255, 0.3635108
    %v296 = vsel %vm292, 1.0, 0.0
    %v297 = vsel %vm293, 1.0, 0.0
    %v298 = vsel %vm294, 1.0, 0.0
    %v299 = vsel %vm295, 1.0, 0.0
    %v300 = vadd.f32 %v288, %v296
    %v301 = vadd.f32 %v289, %v297
    %v302 = vadd.f32 %v290, %v298
    %v303 = vadd.f32 %v291, %v299
    %vm304 = vcmp.ge.f32.partialorder %v252, 0.4462378
    %vm305 = vcmp.ge.f32.partialorder %v253, 0.4462378
    %vm306 = vcmp.ge.f32.partialorder %v254, 0.4462378
    %vm307 = vcmp.ge.f32.partialorder %v255, 0.4462378
    %v308 = vsel %vm304, 1.0, 0.0
    %v309 = vsel %vm305, 1.0, 0.0
    %v310 = vsel %vm306, 1.0, 0.0
    %v311 = vsel %vm307, 1.0, 0.0
    %v312 = vadd.f32 %v300, %v308
    %v313 = vadd.f32 %v301, %v309
    %v314 = vadd.f32 %v302, %v310
    %v315 = vadd.f32 %v303, %v311
    %vm316 = vcmp.ge.f32.partialorder %v252, 0.52393156
    %vm317 = vcmp.ge.f32.partialorder %v253, 0.52393156
    %vm318 = vcmp.ge.f32.partialorder %v254, 0.52393156
    %vm319 = vcmp.ge.f32.partialorder %v255, 0.52393156
    %v320 = vsel %vm316, 1.0, 0.0
    %v321 = vsel %vm317, 1.0, 0.0
    %v322 = vsel %vm318, 1.0, 0.0
    %v323 = vsel %vm319, 1.0, 0.0
    %v324 = vadd.f32 %v312, %v320
    %v325 = vadd.f32 %v313, %v321
    %v326 = vadd.f32 %v314, %v322
    %v327 = vadd.f32 %v315, %v323
    %vm328 = vcmp.ge.f32.partialorder %v252, 0.5977139
    %vm329 = vcmp.ge.f32.partialorder %v253, 0.5977139
    %vm330 = vcmp.ge.f32.partialorder %v254, 0.5977139
    %vm331 = vcmp.ge.f32.partialorder %v255, 0.5977139
    %v332 = vsel %vm328, 1.0, 0.0
    %v333 = vsel %vm329, 1.0, 0.0
    %v334 = vsel %vm330, 1.0, 0.0
    %v335 = vsel %vm331, 1.0, 0.0
    %v336 = vadd.f32 %v324, %v332
    %v337 = vadd.f32 %v325, %v333
    %v338 = vadd.f32 %v326, %v334
    %v339 = vadd.f32 %v327, %v335
    %vm340 = vcmp.ge.f32.partialorder %v252, 0.668396
    %vm341 = vcmp.ge.f32.partialorder %v253, 0.668396
    %vm342 = vcmp.ge.f32.partialorder %v254, 0.668396
    %vm343 = vcmp.ge.f32.partialorder %v255, 0.668396
    %v344 = vsel %vm340, 1.0, 0.0
    %v345 = vsel %vm341, 1.0, 0.0
    %v346 = vsel %vm342, 1.0, 0.0
    %v347 = vsel %vm343, 1.0, 0.0
    %v348 = vadd.f32 %v336, %v344
    %v349 = vadd.f32 %v337, %v345
    %v350 = vadd.f32 %v338, %v346
    %v351 = vadd.f32 %v339, %v347
    %vm352 = vcmp.ge.f32.partialorder %v252, 0.7365875
    %vm353 = vcmp.ge.f32.partialorder %v253, 0.7365875
    %vm354 = vcmp.ge.f32.partialorder %v254, 0.7365875
    %vm355 = vcmp.ge.f32.partialorder %v255, 0.7365875
    %v356 = vsel %vm352, 1.0, 0.0
    %v357 = vsel %vm353, 1.0, 0.0
    %v358 = vsel %vm354, 1.0, 0.0
    %v359 = vsel %vm355, 1.0, 0.0
    %v360 = vadd.f32 %v348, %v356
    %v361 = vadd.f32 %v349, %v357
    %v362 = vadd.f32 %v350, %v358
    %v363 = vadd.f32 %v351, %v359
    %vm364 = vcmp.ge.f32.partialorder %v252, 0.8027612
    %vm365 = vcmp.ge.f32.partialorder %v253, 0.8027612
    %vm366 = vcmp.ge.f32.partialorder %v254, 0.8027612
    %vm367 = vcmp.ge.f32.partialorder %v255, 0.8027612
    %v368 = vsel %vm364, 1.0, 0.0
    %v369 = vsel %vm365, 1.0, 0.0
    %v370 = vsel %vm366, 1.0, 0.0
    %v371 = vsel %vm367, 1.0, 0.0
    %v372 = vadd.f32 %v360, %v368
    %v373 = vadd.f32 %v361, %v369
    %v374 = vadd.f32 %v362, %v370
    %v375 = vadd.f32 %v363, %v371
    %vm376 = vcmp.ge.f32.partialorder %v252, 0.8672928
    %vm377 = vcmp.ge.f32.partialorder %v253, 0.8672928
    %vm378 = vcmp.ge.f32.partialorder %v254, 0.8672928
    %vm379 = vcmp.ge.f32.partialorder %v255, 0.8672928
    %v380 = vsel %vm376, 1.0, 0.0
    %v381 = vsel %vm377, 1.0, 0.0
    %v382 = vsel %vm378, 1.0, 0.0
    %v383 = vsel %vm379, 1.0, 0.0
    %v384 = vadd.f32 %v372, %v380
    %v385 = vadd.f32 %v373, %v381
    %v386 = vadd.f32 %v374, %v382
    %v387 = vadd.f32 %v375, %v383
    %vm388 = vcmp.ge.f32.partialorder %v252, 0.9304877
    %vm389 = vcmp.ge.f32.partialorder %v253, 0.9304877
    %vm390 = vcmp.ge.f32.partialorder %v254, 0.9304877
    %vm391 = vcmp.ge.f32.partialorder %v255, 0.9304877
    %v392 = vsel %vm388, 1.0, 0.0
    %v393 = vsel %vm389, 1.0, 0.0
    %v394 = vsel %vm390, 1.0, 0.0
    %v395 = vsel %vm391, 1.0, 0.0
    %v396 = vadd.f32 %v384, %v392
    %v397 = vadd.f32 %v385, %v393
    %v398 = vadd.f32 %v386, %v394
    %v399 = vadd.f32 %v387, %v395
    %vm400 = vcmp.ge.f32.partialorder %v252, 0.9925986
    %vm401 = vcmp.ge.f32.partialorder %v253, 0.9925986
    %vm402 = vcmp.ge.f32.partialorder %v254, 0.9925986
    %vm403 = vcmp.ge.f32.partialorder %v255, 0.9925986
    %v404 = vsel %vm400, 1.0, 0.0
    %v405 = vsel %vm401, 1.0, 0.0
    %v406 = vsel %vm402, 1.0, 0.0
    %v407 = vsel %vm403, 1.0, 0.0
    %v408 = vadd.f32 %v396, %v404
    %v409 = vadd.f32 %v397, %v405
    %v410 = vadd.f32 %v398, %v406
    %v411 = vadd.f32 %v399, %v407
    %vm412 = vcmp.ge.f32.partialorder %v252, 1.0538378
    %vm413 = vcmp.ge.f32.partialorder %v253, 1.0538378
    %vm414 = vcmp.ge.f32.partialorder %v254, 1.0538378
    %vm415 = vcmp.ge.f32.partialorder %v255, 1.0538378
    %v416 = vsel %vm412, 1.0, 0.0
    %v417 = vsel %vm413, 1.0, 0.0
    %v418 = vsel %vm414, 1.0, 0.0
    %v419 = vsel %vm415, 1.0, 0.0
    %v420 = vadd.f32 %v408, %v416
    %v421 = vadd.f32 %v409, %v417
    %v422 = vadd.f32 %v410, %v418
    %v423 = vadd.f32 %v411, %v419
    %vm424 = vcmp.ge.f32.partialorder %v252, 1.1143861
    %vm425 = vcmp.ge.f32.partialorder %v253, 1.1143861
    %vm426 = vcmp.ge.f32.partialorder %v254, 1.1143861
    %vm427 = vcmp.ge.f32.partialorder %v255, 1.1143861
    %v428 = vsel %vm424, 1.0, 0.0
    %v429 = vsel %vm425, 1.0, 0.0
    %v430 = vsel %vm426, 1.0, 0.0
    %v431 = vsel %vm427, 1.0, 0.0
    %v432 = vadd.f32 %v420, %v428
    %v433 = vadd.f32 %v421, %v429
    %v434 = vadd.f32 %v422, %v430
    %v435 = vadd.f32 %v423, %v431
    %v436 = vpack.c.bf16 %v433, %v432
    %v437 = vpack.c.bf16 %v435, %v434
    %v438 = vld [vmem:[#allocation7] sm:$0xf]
    %v439 = vld [vmem:[#allocation7 + $0x4] sm:$0xf]
    %v440 = vld [vmem:[#allocation7 + $0x8] sm:$0xf]
    %v441 = vld [vmem:[#allocation7 + $0xc] sm:$0xf]
    %v442 = vld [vmem:[#allocation7 + $0x10] sm:$0xf]
    %v443 = vld [vmem:[#allocation7 + $0x14] sm:$0xf]
    %v444 = vld [vmem:[#allocation7 + $0x18] sm:$0xf]
    %v445 = vld [vmem:[#allocation7 + $0x1c] sm:$0xf]
    %v446 = vld [vmem:[#allocation7 + $0x20] sm:$0xf]
    %v447 = vld [vmem:[#allocation7 + $0x24] sm:$0xf]
    %v448 = vld [vmem:[#allocation7 + $0x28] sm:$0xf]
    %v449 = vld [vmem:[#allocation7 + $0x2c] sm:$0xf]
    %v450 = vld [vmem:[#allocation7 + $0x30] sm:$0xf]
    %v451 = vld [vmem:[#allocation7 + $0x34] sm:$0xf]
    %v452 = vld [vmem:[#allocation7 + $0x38] sm:$0xf]
    %v453 = vld [vmem:[#allocation7 + $0x3c] sm:$0xf]
    %v470 = vunpack.c.l.b16 %v438
    %v471 = vunpack.c.l.b16 %v439
    %v472 = vunpack.c.l.b16 %v440
    %v473 = vunpack.c.l.b16 %v441
    %v474 = vunpack.c.l.b16 %v442
    %v475 = vunpack.c.l.b16 %v443
    %v476 = vunpack.c.l.b16 %v444
    %v477 = vunpack.c.l.b16 %v445
    %v478 = vunpack.c.l.b16 %v446
    %v479 = vunpack.c.l.b16 %v447
    %v480 = vunpack.c.l.b16 %v448
    %v481 = vunpack.c.l.b16 %v449
    %v482 = vunpack.c.l.b16 %v450
    %v483 = vunpack.c.l.b16 %v451
    %v484 = vunpack.c.l.b16 %v452
    %v485 = vunpack.c.l.b16 %v453
    %v486 = vpack.c.b16 %v471, %v470
    %v487 = vpack.c.b16 %v473, %v472
    %v488 = vpack.c.b16 %v475, %v474
    %v489 = vpack.c.b16 %v477, %v476
    %v490 = vpack.c.b16 %v479, %v478
    %v491 = vpack.c.b16 %v481, %v480
    %v492 = vpack.c.b16 %v483, %v482
    %v493 = vpack.c.b16 %v485, %v484
    %502 = vmatprep.subr.bf16.mxu0 0
    %503 = vmatpush1.bf16.msra.mxu0 %v486
    %504 = vmatprep.subr.bf16.mxu0 0
    %505 = vmatpush1.bf16.msra.mxu0 %v487
    %506 = vmatprep.subr.bf16.mxu0 0
    %507 = vmatpush1.bf16.msra.mxu0 %v488
    %508 = vmatprep.subr.bf16.mxu0 0
    %509 = vmatpush1.bf16.msra.mxu0 %v489
    %510 = vmatprep.subr.bf16.mxu0 0
    %511 = vmatpush1.bf16.msra.mxu0 %v490
    %512 = vmatprep.subr.bf16.mxu0 0
    %513 = vmatpush1.bf16.msra.mxu0 %v491
    %514 = vmatprep.subr.bf16.mxu0 0
    %515 = vmatpush1.bf16.msra.mxu0 %v492
    %516 = vmatprep.subr.bf16.mxu0 0
    %517 = vmatpush1.bf16.msra.mxu0 %v493
    %518 = vmatprep.subr.bf16.mxu0 0
    %519 = vmatpush1.bf16.msra.mxu0 0
    %520 = vmatprep.subr.bf16.mxu0 0
    %521 = vmatpush1.bf16.msra.mxu0 0
    %522 = vmatprep.subr.bf16.mxu0 0
    %523 = vmatpush1.bf16.msra.mxu0 0
    %524 = vmatprep.subr.bf16.mxu0 0
    %525 = vmatpush1.bf16.msra.mxu0 0
    %526 = vmatprep.subr.bf16.mxu0 0
    %527 = vmatpush1.bf16.msra.mxu0 0
    %528 = vmatprep.subr.bf16.mxu0 0
    %529 = vmatpush1.bf16.msra.mxu0 0
    %530 = vmatprep.subr.bf16.mxu0 0
    %531 = vmatpush1.bf16.msra.mxu0 0
    %532 = vmatprep.subr.bf16.mxu0 0
    %533 = vmatpush1.bf16.msra.mxu0 0
    %534 = vmatprep.mubr.bf16.mxu0 0
    %535 = vmatmul.mubr.bf16.gmra.mrb[0].mxu0 %v436
    %v536 = vpop.f32.mrb[0].mxu0
    %v537 = vadd.f32 0.0, %v536
    %v538 = vpop.f32.mrb[0].mxu0
    %v539 = vpop.f32.mrb[0].mxu0
    %v540 = vadd.f32 0.0, %v539
    %v541 = vpop.f32.mrb[0].mxu0
    %542 = vmatprep.mubr.bf16.mxu0 0
    %543 = vmatmul.mubr.bf16.gmra.mrb[0].mxu0 %v437
    %v544 = vpop.f32.mrb[0].mxu0
    %v545 = vadd.f32 0.0, %v544
    %v546 = vpop.f32.mrb[0].mxu0
    %v547 = vpop.f32.mrb[0].mxu0
    %v548 = vadd.f32 0.0, %v547
    %v549 = vpop.f32.mrb[0].mxu0
    %550 = vdwg.mxu0
    %v551 = vmul.f32 %v537, 0.0044444446
    %v552 = vmul.f32 %v540, 0.0044444446
    %v553 = vmul.f32 %v545, 0.0044444446
    %v554 = vmul.f32 %v548, 0.0044444446
    %v555 = vld [vmem:[%s4] sm:$0x1]
    %v557 = vlaneseq
    %v558 = vshrl.u32 %v557, 7
    %v559 = vsub.s32 0, %v558
    %v560 = vrot.slane %v555, %v559
    %v562 = vadd.f32 %v551, %v560
    %v563 = vadd.f32 %v552, %v560
    %v564 = vadd.f32 %v553, %v560
    %v565 = vadd.f32 %v554, %v560
    %566 = vst [vmem:[#allocation8] sm:$0xff] %v562
    %567 = vst [vmem:[#allocation8 + $0x8] sm:$0xff] %v563
    %568 = vst [vmem:[#allocation8 + $0x10] sm:$0xff] %v564
    %569 = vst [vmem:[#allocation8 + $0x18] sm:$0xff] %v565
    // Predicated region
    $region34: #{tpu_custom_call.1} parent=1 // pred_check
      _
    $region35: #{tpu_custom_call.1} parent=1 // pred_check_branch
      %571 = sbr.rel (0) target = $region37
    $region36: #{tpu_custom_call.1} parent=1 // pred_region
      %s573 = ssub.s32 512, 512
      %574 = vsyncadd [#allocation4], %s573
      %s575 = sshll.u32 [#allocation8], 4
      %s576 = int_to_ptr.vmem [resolvable:$true] %s575
      %581 = dma.vmem_to_hbm [thread:$0]  %s576, 512, %s5, [#allocation4], 128, 128, 8
    $region37: #{tpu_custom_call.1} parent=1 // pred_fallthru
      _
    // Predicated region
    $region38: #{tpu_custom_call.1} parent=1 // pred_check
      _
    $region39: #{tpu_custom_call.1} parent=1 // pred_check_branch
      %583 = sbr.rel (0) target = $region41
    $region40: #{tpu_custom_call.1} parent=1 // pred_region
      %584 = dma.done [#allocation4], 512
    $region41: #{tpu_custom_call.1} parent=1 // pred_fallthru
      _
    %585 = vsyncpa [#allocation3], 1
    %586 = vsyncpa [#allocation6], 1
    %587 = vsyncpa [#allocation4], 1

</llo_original>
